<compile_context>
chip_gen: v7x
topology: tpu7x:2x2x1
jax: 0.10.0
libtpu: 0.0.40
codegen_flags: <defaults>
</compile_context>

<pallas_src>
import numpy as np

import jax
import jax.numpy as jnp
from jax import lax
from jax.experimental import pallas as pl
from jax.experimental.pallas import tpu as pltpu


def _round_up(x, m):
    return -(-int(x) // int(m)) * int(m)


# ---------------------------------------------------------------------------
# generation-aware VMEM budgeting
# ---------------------------------------------------------------------------
def _vmem_caps():
    """Returns (physical VMEM bytes, max vmem_limit_bytes we will request)."""
    try:
        cap = int(pltpu.get_tpu_info().vmem_capacity_bytes)
    except Exception:
        cap = 64 << 20
    if cap >= (100 << 20):                       # v5e / v6e: 128 MiB physical
        return cap, 100 << 20
    # v7x-class (64 MiB / TC): leave ~10 MiB headroom for Mosaic scratch.
    return cap, max(cap - (10 << 20), 32 << 20)


def _choose_tile_n(n, h, cp, nl, requested=None):
    """Pick the token tile (rows per grid step) and the padded token count."""
    n8 = _round_up(max(n, 1), 8)
    if requested is not None:
        tile = max(8, min(_round_up(int(requested), 8), n8))
        return tile, _round_up(n8, tile)

    _, limit_cap = _vmem_caps()
    # resident weights counted once (single-buffered)
    weight_bytes = nl * h * h * 2 + nl * h * 4 + h * cp * 2 + cp * 4
    budget = max(limit_cap - weight_bytes - (8 << 20), 8 << 20)
    # Per-token-row live bytes (two targets batched along rows => factor 2):
    #   double-buffered IO: hidden f32 H + noise 2H f32 + target 2Cp f32
    #   work: h0 / g / step temps (~6 f32 rows of max(H,Cp)) + nl bf16 derivs,
    #         all at M = 2 rows per token.
    io_row = 2 * 4 * (h + 2 * h + 2 * cp)
    work_row = 2 * (6 * 4 * max(h, cp) + nl * 2 * h)
    tile = budget // max(io_row + work_row, 1)
    tile = max(128, min((tile // 128) * 128, 2048))    # 128-aligned MXU M dim
    if n8 >= 256:
        # prefer >= 2 grid steps so the 'parallel' axis splits v7x's 2 TCs
        tile = min(tile, max(128, ((n8 // 2) // 128) * 128))
    tile = _round_up(min(tile, n8), 8)
    return tile, _round_up(n8, tile)


def _vmem_limit_bytes(tile_n, h, cp, nl, single_buffer_weights):
    _, limit_cap = _vmem_caps()
    wmul = 1 if single_buffer_weights else 2
    weights = wmul * (nl * h * h * 2 + nl * h * 4 + h * cp * 2 + cp * 4)
    io = 2 * (tile_n * (h * 4 + 2 * h * 4 + 2 * cp * 4) + 2 * cp * 4)
    m = 2 * tile_n
    work = m * (6 * 4 * max(h, cp) + nl * 2 * h + 4 * h)
    est = weights + io + work + (4 << 20)
    return int(min(limit_cap, max(32 << 20, est)))


# ---------------------------------------------------------------------------
# fused kernel
# ---------------------------------------------------------------------------
def make_fused_alicepp_kernel(nl, num_steps, step_size, epsilon,
                              n_real, n_pad, tile_n, c_real, cp, h):
    grad_scale = 2.0 / float(n_real * c_real)     # real N / real C (not pad)
    fold = float(step_size) * grad_scale          # grad scale folded into step
    needs_mask = (n_pad != n_real)
    m = 2 * tile_n                                # both targets batched on rows

    def kernel(hidden_ref, noise_ref, target_ref, w_ref, b_ref, wh_ref, bh_ref,
               colsum_ref):
        hidden = hidden_ref[...]                                   # (Tn, H) f32
        hidden2 = jnp.concatenate([hidden, hidden], axis=0)        # (M, H)
        noise = noise_ref[...].reshape(m, h)                       # (M, H)  f32
        target = target_ref[...].reshape(m, cp)                    # (M, Cp) f32

        # hoisted loads: forward() is traced 2*num_steps+2 times per tile
        b_all = b_ref[...]                                         # (nl, H)
        biases = [b_all[l] for l in range(nl)]
        bh_row = bh_ref[...]                                       # (1, Cp)
        wh = wh_ref[...]                                           # (H, Cp) bf16

        def forward(h0):
            """bf16 MXU matmuls, f32 accum + f32 tanh; returns logits + bf16 derivs."""
            hcur = h0
            derivs = []
            for l in range(nl):                                    # static unroll
                a = jnp.dot(hcur.astype(jnp.bfloat16), w_ref[l],
                            preferred_element_type=jnp.float32) + biases[l]
                hcur = jnp.tanh(a)
                derivs.append((1.0 - hcur * hcur).astype(jnp.bfloat16))
            logits = jnp.dot(hcur.astype(jnp.bfloat16), wh,
                             preferred_element_type=jnp.float32) + bh_row
            return logits, derivs

        # Contract against the weight's OUTPUT axis: no in-kernel transposes.
        bwd_dims = (((1,), (1,)), ((), ()))

        def vat_step(nz):
            state_p, derivs = forward(hidden2 + nz)
            g = state_p - target                   # MSE grad scale folded below
            g = lax.dot_general(g.astype(jnp.bfloat16), wh, bwd_dims,
                                preferred_element_type=jnp.float32)
            for l in range(nl - 1, -1, -1):
                g = g * derivs[l]                  # d tanh (bf16 * f32 -> f32)
                g = lax.dot_general(g.astype(jnp.bfloat16), w_ref[l], bwd_dims,
                                    preferred_element_type=jnp.float32)
            step = nz + fold * g
            norm = jnp.max(jnp.abs(step), axis=-1, keepdims=True)
            return step * pl.reciprocal(norm + epsilon, approx=True)

        if num_steps >= 3:                         # bound live set for long VAT
            noise = lax.fori_loop(0, num_steps, lambda i, nz: vat_step(nz), noise)
        else:
            for _ in range(num_steps):
                noise = vat_step(noise)

        # final perturbed forward + per-tile partial of the MSE numerator
        state_p, _ = forward(hidden2 + noise)
        diff = state_p - target
        dd = (diff * diff).reshape(2, tile_n, cp)
        if needs_mask:                             # padded token rows -> 0
            row = lax.broadcasted_iota(jnp.int32, (tile_n, 1), 0)
            valid = (pl.program_id(0) * tile_n + row) < n_real
            dd = dd * valid.astype(jnp.float32)[None]
        colsum_ref[...] = jnp.sum(dd, axis=1)[None]                # (1, 2, Cp)

    return kernel


# ---------------------------------------------------------------------------
# pallas_call wrapper
# ---------------------------------------------------------------------------
def _fused_alicepp_call(hidden_p, noise2, targets, w_used, b_used, wh_p, bh_p, *,
                        num_steps, step_size, epsilon, n_real, c_real, tile_n,
                        single_buffer_weights):
    n_pad, h = hidden_p.shape
    cp = targets.shape[-1]
    nl = int(w_used.shape[0])
    assert n_pad % tile_n == 0
    num_tiles = n_pad // tile_n

    kernel = make_fused_alicepp_kernel(nl, num_steps, step_size, epsilon,
                                       n_real, n_pad, tile_n, c_real, cp, h)

    def _wspec(shape, index_map):
        # Weights never change across grid steps: request single-buffering so
        # they are not double-buffered into VMEM (biggest recovery on v7x).
        if single_buffer_weights:
            try:
                return pl.BlockSpec(shape, index_map, pipeline_mode=pl.Buffered(1))
            except (TypeError, AttributeError):
                pass                               # older JAX without pipeline_mode
        return pl.BlockSpec(shape, index_map)

    grid_spec = pltpu.PrefetchScalarGridSpec(
        num_scalar_prefetch=0,
        grid=(num_tiles,),
        in_specs=[
            pl.BlockSpec((tile_n, h), lambda i: (i, 0)),           # hidden tile
            pl.BlockSpec((2, tile_n, h), lambda i: (0, i, 0)),     # noise (2 targets)
            pl.BlockSpec((2, tile_n, cp), lambda i: (0, i, 0)),    # targets (padded C)
            _wspec((nl, h, h), lambda i: (0, 0, 0)),               # W      (resident)
            _wspec((nl, h), lambda i: (0, 0)),                     # b      (resident)
            _wspec((h, cp), lambda i: (0, 0)),                     # W_head (resident)
            _wspec((1, cp), lambda i: (0, 0)),                     # b_head (resident)
        ],
        out_specs=pl.BlockSpec((1, 2, cp), lambda i: (i, 0, 0)),   # per-tile partials
    )

    fwd_flops_row = 2 * h * h * nl + 2 * h * cp
    flops = 2 * n_pad * (2 * num_steps + 1) * fwd_flops_row
    transcendentals = 2 * n_pad * (num_steps + 1) * h * nl
    bytes_accessed = (n_pad * h * 4 + 2 * n_pad * h * 4 + 2 * n_pad * cp * 4
                      + nl * h * h * 2 + nl * h * 4 + h * cp * 2 + cp * 4
                      + num_tiles * 2 * cp * 4)

    return pl.pallas_call(
        kernel,
        out_shape=jax.ShapeDtypeStruct((num_tiles, 2, cp), jnp.float32),
        grid_spec=grid_spec,
        compiler_params=pltpu.CompilerParams(
            dimension_semantics=("parallel",),        # megacore split on v7x
            vmem_limit_bytes=_vmem_limit_bytes(tile_n, h, cp, nl,
                                               single_buffer_weights)),
        cost_estimate=pl.CostEstimate(flops=int(flops),
                                      transcendentals=int(transcendentals),
                                      bytes_accessed=int(bytes_accessed)),
    )(hidden_p, noise2, targets, w_used, b_used, wh_p, bh_p)


# ---------------------------------------------------------------------------
# ALICEPPLoss.forward equivalent
# ---------------------------------------------------------------------------
def alicepp_loss(hiddens, state, labels, params, key, *, num_layers,
                 num_classes=None, alpha=1.0, num_steps=1, step_size=1e-3,
                 epsilon=1e-6, noise_var=1e-5, layer_id=None, tile_n=None):
    w, b, wh, bh = params
    if layer_id is None:
        # torch.randint(0, num_layers, (1,)) — drawn host-side per call (static;
        # one compile per layer id), avoiding a device->host sync.
        layer_id = int(np.random.randint(0, num_layers))
    layer_id = int(layer_id)

    hidden = jnp.asarray(hiddens[layer_id], jnp.float32)
    n, h_dim = hidden.shape
    c = int(wh.shape[-1])
    cp = max(128, _round_up(c, 128))               # lane-dense padded class dim
    pad_c = cp - c
    nl = int(w.shape[0]) - layer_id

    tile, n_pad = _choose_tile_n(n, h_dim, cp, nl, tile_n)
    pad_n = n_pad - n

    # noise = randn_like(hidden) * noise_var — one draw per loss term (virtual, gold)
    key_v, key_g = jax.random.split(key, 2)
    noise2 = jnp.stack(
        [jax.random.normal(key_v, hidden.shape, jnp.float32),
         jax.random.normal(key_g, hidden.shape, jnp.float32)], axis=0) * noise_var
    noise2 = jnp.pad(noise2, ((0, 0), (0, pad_n), (0, 0)))

    # TODO(synk): F.one_hot infers num_classes from max(labels); we use the head width.
    onehot = jax.nn.one_hot(labels.reshape(-1), c, dtype=jnp.float32)
    targets = jnp.stack(
        [jnp.pad(state.astype(jnp.float32), ((0, 0), (0, pad_c))),
         jnp.pad(onehot, ((0, 0), (0, pad_c)))], axis=0)
    targets = jnp.pad(targets, ((0, 0), (0, pad_n), (0, 0)))

    hidden_p = jnp.pad(hidden, ((0, pad_n), (0, 0)))

    # unused leading layers sliced off; bf16 weights for the MXU; f32 biases;
    # zero-padded head columns keep loss / grad numerically identical.
    w_used = jnp.asarray(w, jnp.float32)[layer_id:].astype(jnp.bfloat16)
    b_used = jnp.asarray(b, jnp.float32)[layer_id:]
    wh_p = jnp.pad(jnp.asarray(wh, jnp.float32), ((0, 0), (0, pad_c))).astype(jnp.bfloat16)
    bh_p = jnp.pad(jnp.asarray(bh, jnp.float32).reshape(1, -1), ((0, 0), (0, pad_c)))

    kwargs = dict(num_steps=num_steps, step_size=step_size, epsilon=epsilon,
                  n_real=n, c_real=c, tile_n=tile)
    try:
        colsums = jax.block_until_ready(
            _fused_alicepp_call(hidden_p, noise2, targets, w_used, b_used, wh_p,
                                bh_p, single_buffer_weights=True, **kwargs))
    except Exception:
        # Fallback for JAX/Mosaic versions that reject Buffered(1) pipelining.
        colsums = _fused_alicepp_call(hidden_p, noise2, targets, w_used, b_used,
                                      wh_p, bh_p, single_buffer_weights=False,
                                      **kwargs)

    per_target = jnp.sum(colsums, axis=(0, 2)) / float(n * c)   # tiny finish on host
    virtual_loss, label_loss = per_target[0], per_target[1]
    return label_loss + alpha * virtual_loss


# ---------------------------------------------------------------------------
# pure-JAX reference replicating the kernel math (same bf16 casts / grad-scale
# folding / bf16 tanh-derivative storage) for testing.  NOTE: the bf16 cast of
# (hidden + noise) rounds away the 1e-5 initial perturbation, so this matches
# the kernel but not an f32 PyTorch ALICEPPLoss beyond ~1e-2 relative.
# ---------------------------------------------------------------------------
def _reference_loss(hiddens, state, labels, params, key, *, layer_id, alpha,
                    num_steps, step_size, epsilon, noise_var):
    w, b, wh, bh = params
    hidden = jnp.asarray(hiddens[layer_id], jnp.float32)
    n, _ = hidden.shape
    c = int(wh.shape[-1])
    nl = int(w.shape[0]) - layer_id
    w_bf = jnp.asarray(w, jnp.float32)[layer_id:].astype(jnp.bfloat16)
    b_used = jnp.asarray(b, jnp.float32)[layer_id:]
    wh_bf = jnp.asarray(wh, jnp.float32).astype(jnp.bfloat16)
    bh_f = jnp.asarray(bh, jnp.float32).reshape(1, -1)
    dims = (((1,), (1,)), ((), ()))
    fold = float(step_size) * 2.0 / float(n * c)

    def forward(h0):
        h = h0
        derivs = []
        for l in range(nl):
            a = jnp.dot(h.astype(jnp.bfloat16), w_bf[l],
                        preferred_element_type=jnp.float32) + b_used[l]
            h = jnp.tanh(a)
            derivs.append((1.0 - h * h).astype(jnp.bfloat16))
        s = jnp.dot(h.astype(jnp.bfloat16), wh_bf,
                    preferred_element_type=jnp.float32) + bh_f
        return s, derivs

    key_v, key_g = jax.random.split(key, 2)
    onehot = jax.nn.one_hot(labels.reshape(-1), c, dtype=jnp.float32)
    losses = []
    for noise_key, target in ((key_v, state.astype(jnp.float32)), (key_g, onehot)):
        noise = jax.random.normal(noise_key, hidden.shape, jnp.float32) * noise_var
        for _ in range(num_steps):
            sp, derivs = forward(hidden + noise)
            g = sp - target
            g = lax.dot_general(g.astype(jnp.bfloat16), wh_bf, dims,
                                preferred_element_type=jnp.float32)
            for l in range(nl - 1, -1, -1):
                g = g * derivs[l]
                g = lax.dot_general(g.astype(jnp.bfloat16), w_bf[l], dims,
                                    preferred_element_type=jnp.float32)
            step = noise + fold * g
            norm = jnp.max(jnp.abs(step), axis=-1, keepdims=True)
            noise = step / (norm + epsilon)
        sp, _ = forward(hidden + noise)
        losses.append(jnp.mean((sp - target) ** 2))
    virtual_loss, label_loss = losses
    return label_loss + alpha * virtual_loss


# ---------------------------------------------------------------------------
if __name__ == "__main__":
    B, S, H, C, L = 2, 7, 32, 8, 3                 # N=14 exercises row padding/masking
    key = jax.random.PRNGKey(0)
    k_emb, k_w, k_b, k_wh, k_lab, k_layer, k_loss = jax.random.split(key, 7)

    # deterministic synthetic "model" parameters (f32 master copy)
    w = jax.random.normal(k_w, (L, H, H), jnp.float32) / jnp.sqrt(float(H))
    b = 0.01 * jax.random.normal(k_b, (L, H), jnp.float32)
    wh = jax.random.normal(k_wh, (H, C), jnp.float32) / jnp.sqrt(float(H))
    bh = jnp.zeros((1, C), jnp.float32)

    # plain-JAX glue: per-layer hidden-state list and the clean output `state`
    emb = jax.random.normal(k_emb, (B * S, H), jnp.float32)
    hiddens = []
    h = emb
    for l in range(L):
        hiddens.append(h)
        h = jnp.tanh(h @ w[l] + b[l])
    state = h @ wh + bh                            # (B*S, C)

    labels = jax.random.randint(k_lab, (B * S,), 0, C)

    # random layer draw (torch.randint equivalent), deterministic for the demo
    layer_id = int(jax.random.randint(k_layer, (), 0, L))

    common = dict(num_layers=L, num_classes=C, layer_id=layer_id, alpha=1.0,
                  num_steps=1, step_size=1e-3, epsilon=1e-6, noise_var=1e-5)

    # 1) auto tile policy (single tile here) and 2) explicit small tile that
    #    exercises the multi-tile grid + padded-row masking.
    loss_auto = jax.block_until_ready(
        alicepp_loss(hiddens, state, labels, (w, b, wh, bh), k_loss, **common))
    loss_tiled = jax.block_until_ready(
        alicepp_loss(hiddens, state, labels, (w, b, wh, bh), k_loss, tile_n=8,
                     **common))

    assert bool(jnp.isfinite(loss_auto)) and bool(jnp.isfinite(loss_tiled))

    ref = _reference_loss(hiddens, state, labels, (w, b, wh, bh), k_loss,
                          layer_id=layer_id, alpha=1.0, num_steps=1,
                          step_size=1e-3, epsilon=1e-6, noise_var=1e-5)
    np.testing.assert_allclose(np.asarray(loss_auto), np.asarray(ref),
                               rtol=2e-2, atol=1e-3)
    np.testing.assert_allclose(np.asarray(loss_tiled), np.asarray(ref),
                               rtol=2e-2, atol=1e-3)
    print("KERNEL_OK")
</pallas_src>

<mosaic_0001>
module attributes {stable_mosaic.version = 11 : i64} {
  func.func @kernel(%arg0: i32, %arg1: memref<16x32xf32, #tpu.memory_space<vmem>>, %arg2: memref<2x16x32xf32, #tpu.memory_space<vmem>>, %arg3: memref<2x16x128xf32, #tpu.memory_space<vmem>>, %arg4: memref<2x32x32xbf16, #tpu.memory_space<vmem>>, %arg5: memref<2x32xf32, #tpu.memory_space<vmem>>, %arg6: memref<32x128xbf16, #tpu.memory_space<vmem>>, %arg7: memref<1x128xf32, #tpu.memory_space<vmem>>, %arg8: memref<1x2x128xf32, #tpu.memory_space<vmem>>) attributes {dimension_semantics = [#tpu.dimension_semantics<parallel>], iteration_bounds = array<i64: 1>, scalar_prefetch = 0 : i64, scratch_operands = 0 : i64, tpu.core_type = #tpu.core_type<tc>, window_params = [{transform_indices = @transform_0, window_bounds = array<i64: 16, 32>}, {transform_indices = @transform_1, window_bounds = array<i64: 2, 16, 32>}, {transform_indices = @transform_2, window_bounds = array<i64: 2, 16, 128>}, {pipeline_mode = #tpu.pipeline_mode<synchronous>, transform_indices = @transform_3, window_bounds = array<i64: 2, 32, 32>}, {pipeline_mode = #tpu.pipeline_mode<synchronous>, transform_indices = @transform_4, window_bounds = array<i64: 2, 32>}, {pipeline_mode = #tpu.pipeline_mode<synchronous>, transform_indices = @transform_5, window_bounds = array<i64: 32, 128>}, {pipeline_mode = #tpu.pipeline_mode<synchronous>, transform_indices = @transform_6, window_bounds = array<i64: 1, 128>}, {transform_indices = @transform_7, window_bounds = array<i64: 1, 2, 128>}]} {
    %c0 = arith.constant 0 : index
    %c0_0 = arith.constant 0 : index
    %0 = vector.load %arg1[%c0, %c0_0] : memref<16x32xf32, #tpu.memory_space<vmem>>, vector<16x32xf32>
    %1 = tpu.concatenate %0, %0 in 0 : vector<16x32xf32>, vector<16x32xf32> -> vector<32x32xf32>
    %c0_1 = arith.constant 0 : index
    %c0_2 = arith.constant 0 : index
    %c0_3 = arith.constant 0 : index
    %2 = vector.load %arg2[%c0_1, %c0_2, %c0_3] : memref<2x16x32xf32, #tpu.memory_space<vmem>>, vector<2x16x32xf32>
    %3 = vector.shape_cast %2 : vector<2x16x32xf32> to vector<32x32xf32>
    %c0_4 = arith.constant 0 : index
    %c0_5 = arith.constant 0 : index
    %c0_6 = arith.constant 0 : index
    %4 = vector.load %arg3[%c0_4, %c0_5, %c0_6] : memref<2x16x128xf32, #tpu.memory_space<vmem>>, vector<2x16x128xf32>
    %5 = vector.shape_cast %4 : vector<2x16x128xf32> to vector<32x128xf32>
    %c0_7 = arith.constant 0 : index
    %c0_8 = arith.constant 0 : index
    %6 = vector.load %arg5[%c0_7, %c0_8] : memref<2x32xf32, #tpu.memory_space<vmem>>, vector<2x32xf32>
    %7 = vector.extract_strided_slice %6 {offsets = [0, 0], sizes = [1, 32], strides = [1, 1]} : vector<2x32xf32> to vector<1x32xf32>
    %8 = vector.shape_cast %7 : vector<1x32xf32> to vector<32xf32>
    %9 = vector.extract_strided_slice %6 {offsets = [1, 0], sizes = [1, 32], strides = [1, 1]} : vector<2x32xf32> to vector<1x32xf32>
    %10 = vector.shape_cast %9 : vector<1x32xf32> to vector<32xf32>
    %c0_9 = arith.constant 0 : index
    %c0_10 = arith.constant 0 : index
    %11 = vector.load %arg7[%c0_9, %c0_10] : memref<1x128xf32, #tpu.memory_space<vmem>>, vector<1x128xf32>
    %c0_11 = arith.constant 0 : index
    %c0_12 = arith.constant 0 : index
    %12 = vector.load %arg6[%c0_11, %c0_12] : memref<32x128xbf16, #tpu.memory_space<vmem>>, vector<32x128xbf16>
    %13 = arith.addf %1, %3 : vector<32x32xf32>
    %14 = arith.truncf %13 : vector<32x32xf32> to vector<32x32xbf16>
    %c0_13 = arith.constant 0 : index
    %c0_14 = arith.constant 0 : index
    %c0_15 = arith.constant 0 : index
    %15 = vector.load %arg4[%c0_13, %c0_14, %c0_15] : memref<2x32x32xbf16, #tpu.memory_space<vmem>>, vector<1x32x32xbf16>
    %16 = vector.shape_cast %15 : vector<1x32x32xbf16> to vector<32x32xbf16>
    %cst = arith.constant dense<0.000000e+00> : vector<32x32xf32>
    %17 = tpu.matmul %14, %16, %cst {dimension_numbers = #tpu.dot_dimension_numbers<[1], [0], [0], [1], [0, 0, 1, 1], [], []>} : vector<32x32xbf16>, vector<32x32xbf16>, vector<32x32xf32> -> vector<32x32xf32>
    %18 = vector.shape_cast %8 : vector<32xf32> to vector<1x32xf32>
    %19 = vector.broadcast %18 : vector<1x32xf32> to vector<32x32xf32>
    %20 = arith.addf %17, %19 : vector<32x32xf32>
    %21 = math.tanh %20 : vector<32x32xf32>
    %22 = arith.mulf %21, %21 : vector<32x32xf32>
    %cst_16 = arith.constant 1.000000e+00 : f32
    %23 = vector.broadcast %cst_16 : f32 to vector<32x32xf32>
    %24 = arith.subf %23, %22 : vector<32x32xf32>
    %25 = arith.truncf %24 : vector<32x32xf32> to vector<32x32xbf16>
    %26 = arith.truncf %21 : vector<32x32xf32> to vector<32x32xbf16>
    %c1 = arith.constant 1 : index
    %c0_17 = arith.constant 0 : index
    %c0_18 = arith.constant 0 : index
    %27 = vector.load %arg4[%c1, %c0_17, %c0_18] : memref<2x32x32xbf16, #tpu.memory_space<vmem>>, vector<1x32x32xbf16>
    %28 = vector.shape_cast %27 : vector<1x32x32xbf16> to vector<32x32xbf16>
    %cst_19 = arith.constant dense<0.000000e+00> : vector<32x32xf32>
    %29 = tpu.matmul %26, %28, %cst_19 {dimension_numbers = #tpu.dot_dimension_numbers<[1], [0], [0], [1], [0, 0, 1, 1], [], []>} : vector<32x32xbf16>, vector<32x32xbf16>, vector<32x32xf32> -> vector<32x32xf32>
    %30 = vector.shape_cast %10 : vector<32xf32> to vector<1x32xf32>
    %31 = vector.broadcast %30 : vector<1x32xf32> to vector<32x32xf32>
    %32 = arith.addf %29, %31 : vector<32x32xf32>
    %33 = math.tanh %32 : vector<32x32xf32>
    %34 = arith.mulf %33, %33 : vector<32x32xf32>
    %cst_20 = arith.constant 1.000000e+00 : f32
    %35 = vector.broadcast %cst_20 : f32 to vector<32x32xf32>
    %36 = arith.subf %35, %34 : vector<32x32xf32>
    %37 = arith.truncf %36 : vector<32x32xf32> to vector<32x32xbf16>
    %38 = arith.truncf %33 : vector<32x32xf32> to vector<32x32xbf16>
    %cst_21 = arith.constant dense<0.000000e+00> : vector<32x128xf32>
    %39 = tpu.matmul %38, %12, %cst_21 {dimension_numbers = #tpu.dot_dimension_numbers<[1], [0], [0], [1], [0, 0, 1, 1], [], []>} : vector<32x32xbf16>, vector<32x128xbf16>, vector<32x128xf32> -> vector<32x128xf32>
    %40 = vector.broadcast %11 : vector<1x128xf32> to vector<32x128xf32>
    %41 = arith.addf %39, %40 : vector<32x128xf32>
    %42 = arith.subf %41, %5 : vector<32x128xf32>
    %43 = arith.truncf %42 : vector<32x128xf32> to vector<32x128xbf16>
    %cst_22 = arith.constant dense<0.000000e+00> : vector<32x32xf32>
    %44 = tpu.matmul %43, %12, %cst_22 {dimension_numbers = #tpu.dot_dimension_numbers<[1], [1], [0], [0], [0, 0, 1, 0], [], []>} : vector<32x128xbf16>, vector<32x128xbf16>, vector<32x32xf32> -> vector<32x32xf32>
    %45 = arith.extf %37 : vector<32x32xbf16> to vector<32x32xf32>
    %46 = arith.mulf %44, %45 : vector<32x32xf32>
    %47 = arith.truncf %46 : vector<32x32xf32> to vector<32x32xbf16>
    %c1_23 = arith.constant 1 : index
    %c0_24 = arith.constant 0 : index
    %c0_25 = arith.constant 0 : index
    %48 = vector.load %arg4[%c1_23, %c0_24, %c0_25] : memref<2x32x32xbf16, #tpu.memory_space<vmem>>, vector<1x32x32xbf16>
    %49 = vector.shape_cast %48 : vector<1x32x32xbf16> to vector<32x32xbf16>
    %cst_26 = arith.constant dense<0.000000e+00> : vector<32x32xf32>
    %50 = tpu.matmul %47, %49, %cst_26 {dimension_numbers = #tpu.dot_dimension_numbers<[1], [1], [0], [0], [0, 0, 1, 0], [], []>} : vector<32x32xbf16>, vector<32x32xbf16>, vector<32x32xf32> -> vector<32x32xf32>
    %51 = arith.extf %25 : vector<32x32xbf16> to vector<32x32xf32>
    %52 = arith.mulf %50, %51 : vector<32x32xf32>
    %53 = arith.truncf %52 : vector<32x32xf32> to vector<32x32xbf16>
    %c0_27 = arith.constant 0 : index
    %c0_28 = arith.constant 0 : index
    %c0_29 = arith.constant 0 : index
    %54 = vector.load %arg4[%c0_27, %c0_28, %c0_29] : memref<2x32x32xbf16, #tpu.memory_space<vmem>>, vector<1x32x32xbf16>
    %55 = vector.shape_cast %54 : vector<1x32x32xbf16> to vector<32x32xbf16>
    %cst_30 = arith.constant dense<0.000000e+00> : vector<32x32xf32>
    %56 = tpu.matmul %53, %55, %cst_30 {dimension_numbers = #tpu.dot_dimension_numbers<[1], [1], [0], [0], [0, 0, 1, 0], [], []>} : vector<32x32xbf16>, vector<32x32xbf16>, vector<32x32xf32> -> vector<32x32xf32>
    %cst_31 = arith.constant 1.78571427E-5 : f32
    %57 = vector.broadcast %cst_31 : f32 to vector<32x32xf32>
    %58 = arith.mulf %57, %56 : vector<32x32xf32>
    %59 = arith.addf %3, %58 : vector<32x32xf32>
    %60 = math.absf %59 : vector<32x32xf32>
    %cst_32 = arith.constant dense<0xFF800000> : vector<32xf32>
    %61 = vector.multi_reduction <maximumf>, %60, %cst_32 [1] : vector<32x32xf32> to vector<32xf32>
    %62 = vector.shape_cast %61 : vector<32xf32> to vector<32x1xf32>
    %cst_33 = arith.constant 9.99999997E-7 : f32
    %63 = vector.broadcast %cst_33 : f32 to vector<32x1xf32>
    %64 = arith.addf %62, %63 : vector<32x1xf32>
    %65 = tpu.reciprocal %64 {approx = true} : vector<32x1xf32> -> vector<32x1xf32>
    %66 = vector.broadcast %65 : vector<32x1xf32> to vector<32x32xf32>
    %67 = arith.mulf %59, %66 : vector<32x32xf32>
    %68 = arith.addf %1, %67 : vector<32x32xf32>
    %69 = arith.truncf %68 : vector<32x32xf32> to vector<32x32xbf16>
    %c0_34 = arith.constant 0 : index
    %c0_35 = arith.constant 0 : index
    %c0_36 = arith.constant 0 : index
    %70 = vector.load %arg4[%c0_34, %c0_35, %c0_36] : memref<2x32x32xbf16, #tpu.memory_space<vmem>>, vector<1x32x32xbf16>
    %71 = vector.shape_cast %70 : vector<1x32x32xbf16> to vector<32x32xbf16>
    %cst_37 = arith.constant dense<0.000000e+00> : vector<32x32xf32>
    %72 = tpu.matmul %69, %71, %cst_37 {dimension_numbers = #tpu.dot_dimension_numbers<[1], [0], [0], [1], [0, 0, 1, 1], [], []>} : vector<32x32xbf16>, vector<32x32xbf16>, vector<32x32xf32> -> vector<32x32xf32>
    %73 = vector.shape_cast %8 : vector<32xf32> to vector<1x32xf32>
    %74 = vector.broadcast %73 : vector<1x32xf32> to vector<32x32xf32>
    %75 = arith.addf %72, %74 : vector<32x32xf32>
    %76 = math.tanh %75 : vector<32x32xf32>
    %77 = arith.truncf %76 : vector<32x32xf32> to vector<32x32xbf16>
    %c1_38 = arith.constant 1 : index
    %c0_39 = arith.constant 0 : index
    %c0_40 = arith.constant 0 : index
    %78 = vector.load %arg4[%c1_38, %c0_39, %c0_40] : memref<2x32x32xbf16, #tpu.memory_space<vmem>>, vector<1x32x32xbf16>
    %79 = vector.shape_cast %78 : vector<1x32x32xbf16> to vector<32x32xbf16>
    %cst_41 = arith.constant dense<0.000000e+00> : vector<32x32xf32>
    %80 = tpu.matmul %77, %79, %cst_41 {dimension_numbers = #tpu.dot_dimension_numbers<[1], [0], [0], [1], [0, 0, 1, 1], [], []>} : vector<32x32xbf16>, vector<32x32xbf16>, vector<32x32xf32> -> vector<32x32xf32>
    %81 = vector.shape_cast %10 : vector<32xf32> to vector<1x32xf32>
    %82 = vector.broadcast %81 : vector<1x32xf32> to vector<32x32xf32>
    %83 = arith.addf %80, %82 : vector<32x32xf32>
    %84 = math.tanh %83 : vector<32x32xf32>
    %85 = arith.truncf %84 : vector<32x32xf32> to vector<32x32xbf16>
    %cst_42 = arith.constant dense<0.000000e+00> : vector<32x128xf32>
    %86 = tpu.matmul %85, %12, %cst_42 {dimension_numbers = #tpu.dot_dimension_numbers<[1], [0], [0], [1], [0, 0, 1, 1], [], []>} : vector<32x32xbf16>, vector<32x128xbf16>, vector<32x128xf32> -> vector<32x128xf32>
    %87 = vector.broadcast %11 : vector<1x128xf32> to vector<32x128xf32>
    %88 = arith.addf %86, %87 : vector<32x128xf32>
    %89 = arith.subf %88, %5 : vector<32x128xf32>
    %90 = arith.mulf %89, %89 : vector<32x128xf32>
    %91 = vector.shape_cast %90 : vector<32x128xf32> to vector<2x16x128xf32>
    %92 = tpu.iota {dimensions = array<i32: 0>} : vector<16x1xi32>
    %c16_i32 = arith.constant 16 : i32
    %93 = arith.muli %arg0, %c16_i32 : i32
    %94 = vector.broadcast %93 : i32 to vector<16x1xi32>
    %95 = arith.addi %94, %92 : vector<16x1xi32>
    %c14_i32 = arith.constant 14 : i32
    %96 = vector.broadcast %c14_i32 : i32 to vector<16x1xi32>
    %97 = arith.cmpi slt, %95, %96 : vector<16x1xi32>
    %98 = arith.extui %97 : vector<16x1xi1> to vector<16x1xi32>
    %99 = arith.sitofp %98 : vector<16x1xi32> to vector<16x1xf32>
    %100 = vector.shape_cast %99 : vector<16x1xf32> to vector<1x16x1xf32>
    %101 = vector.broadcast %100 : vector<1x16x1xf32> to vector<2x16x128xf32>
    %102 = arith.mulf %91, %101 : vector<2x16x128xf32>
    %cst_43 = arith.constant dense<0.000000e+00> : vector<2x128xf32>
    %103 = vector.multi_reduction <add>, %102, %cst_43 [1] : vector<2x16x128xf32> to vector<2x128xf32>
    %104 = vector.shape_cast %103 : vector<2x128xf32> to vector<1x2x128xf32>
    %c0_44 = arith.constant 0 : index
    %c0_45 = arith.constant 0 : index
    %c0_46 = arith.constant 0 : index
    %105 = vector.load %arg8[%c0_44, %c0_45, %c0_46] : memref<1x2x128xf32, #tpu.memory_space<vmem>>, vector<1x2x128xf32>
    tpu.vector_store %arg8[%c0_44, %c0_45, %c0_46], %104 {strides = array<i32>} : memref<1x2x128xf32, #tpu.memory_space<vmem>>, vector<1x2x128xf32>,
    return
  }
  func.func @transform_0(%arg0: i32) -> (i32, i32) {
    %c0_i32 = arith.constant 0 : i32
    %c0_i32_0 = arith.constant 0 : i32
    return %arg0, %c0_i32 : i32, i32
  }
  func.func @transform_1(%arg0: i32) -> (i32, i32, i32) {
    %c0_i32 = arith.constant 0 : i32
    %c0_i32_0 = arith.constant 0 : i32
    %c0_i32_1 = arith.constant 0 : i32
    return %c0_i32, %arg0, %c0_i32_0 : i32, i32, i32
  }
  func.func @transform_2(%arg0: i32) -> (i32, i32, i32) {
    %c0_i32 = arith.constant 0 : i32
    %c0_i32_0 = arith.constant 0 : i32
    %c0_i32_1 = arith.constant 0 : i32
    return %c0_i32, %arg0, %c0_i32_0 : i32, i32, i32
  }
  func.func @transform_3(%arg0: i32) -> (i32, i32, i32) {
    %c0_i32 = arith.constant 0 : i32
    %c0_i32_0 = arith.constant 0 : i32
    %c0_i32_1 = arith.constant 0 : i32
    %c0_i32_2 = arith.constant 0 : i32
    return %c0_i32, %c0_i32_0, %c0_i32_1 : i32, i32, i32
  }
  func.func @transform_4(%arg0: i32) -> (i32, i32) {
    %c0_i32 = arith.constant 0 : i32
    %c0_i32_0 = arith.constant 0 : i32
    %c0_i32_1 = arith.constant 0 : i32
    return %c0_i32, %c0_i32_0 : i32, i32
  }
  func.func @transform_5(%arg0: i32) -> (i32, i32) {
    %c0_i32 = arith.constant 0 : i32
    %c0_i32_0 = arith.constant 0 : i32
    %c0_i32_1 = arith.constant 0 : i32
    return %c0_i32, %c0_i32_0 : i32, i32
  }
  func.func @transform_6(%arg0: i32) -> (i32, i32) {
    %c0_i32 = arith.constant 0 : i32
    %c0_i32_0 = arith.constant 0 : i32
    %c0_i32_1 = arith.constant 0 : i32
    return %c0_i32, %c0_i32_0 : i32, i32
  }
  func.func @transform_7(%arg0: i32) -> (i32, i32, i32) {
    %c0_i32 = arith.constant 0 : i32
    %c0_i32_0 = arith.constant 0 : i32
    %c0_i32_1 = arith.constant 0 : i32
    return %arg0, %c0_i32, %c0_i32_0 : i32, i32, i32
  }
}

module attributes {stable_mosaic.version = 11 : i64} {
  func.func @kernel(%arg0: i32, %arg1: memref<16x32xf32, #tpu.memory_space<vmem>>, %arg2: memref<2x16x32xf32, #tpu.memory_space<vmem>>, %arg3: memref<2x16x128xf32, #tpu.memory_space<vmem>>, %arg4: memref<2x32x32xbf16, #tpu.memory_space<vmem>>, %arg5: memref<2x32xf32, #tpu.memory_space<vmem>>, %arg6: memref<32x128xbf16, #tpu.memory_space<vmem>>, %arg7: memref<1x128xf32, #tpu.memory_space<vmem>>, %arg8: memref<1x2x128xf32, #tpu.memory_space<vmem>>) attributes {dimension_semantics = [#tpu.dimension_semantics<parallel>], iteration_bounds = array<i64: 1>, scalar_prefetch = 0 : i64, scratch_operands = 0 : i64, tpu.core_type = #tpu.core_type<tc>, window_params = [{transform_indices = @transform_0, window_bounds = array<i64: 16, 32>}, {transform_indices = @transform_1, window_bounds = array<i64: 2, 16, 32>}, {transform_indices = @transform_2, window_bounds = array<i64: 2, 16, 128>}, {pipeline_mode = #tpu.pipeline_mode<synchronous>, transform_indices = @transform_3, window_bounds = array<i64: 2, 32, 32>}, {pipeline_mode = #tpu.pipeline_mode<synchronous>, transform_indices = @transform_4, window_bounds = array<i64: 2, 32>}, {pipeline_mode = #tpu.pipeline_mode<synchronous>, transform_indices = @transform_5, window_bounds = array<i64: 32, 128>}, {pipeline_mode = #tpu.pipeline_mode<synchronous>, transform_indices = @transform_6, window_bounds = array<i64: 1, 128>}, {transform_indices = @transform_7, window_bounds = array<i64: 1, 2, 128>}]} {
    %c0 = arith.constant 0 : index
    %c0_0 = arith.constant 0 : index
    %0 = vector.load %arg1[%c0, %c0_0] : memref<16x32xf32, #tpu.memory_space<vmem>>, vector<16x32xf32>
    %1 = tpu.concatenate %0, %0 in 0 : vector<16x32xf32>, vector<16x32xf32> -> vector<32x32xf32>
    %c0_1 = arith.constant 0 : index
    %c0_2 = arith.constant 0 : index
    %c0_3 = arith.constant 0 : index
    %2 = vector.load %arg2[%c0_1, %c0_2, %c0_3] : memref<2x16x32xf32, #tpu.memory_space<vmem>>, vector<2x16x32xf32>
    %3 = vector.shape_cast %2 : vector<2x16x32xf32> to vector<32x32xf32>
    %c0_4 = arith.constant 0 : index
    %c0_5 = arith.constant 0 : index
    %c0_6 = arith.constant 0 : index
    %4 = vector.load %arg3[%c0_4, %c0_5, %c0_6] : memref<2x16x128xf32, #tpu.memory_space<vmem>>, vector<2x16x128xf32>
    %5 = vector.shape_cast %4 : vector<2x16x128xf32> to vector<32x128xf32>
    %c0_7 = arith.constant 0 : index
    %c0_8 = arith.constant 0 : index
    %6 = vector.load %arg5[%c0_7, %c0_8] : memref<2x32xf32, #tpu.memory_space<vmem>>, vector<2x32xf32>
    %7 = vector.extract_strided_slice %6 {offsets = [0, 0], sizes = [1, 32], strides = [1, 1]} : vector<2x32xf32> to vector<1x32xf32>
    %8 = vector.shape_cast %7 : vector<1x32xf32> to vector<32xf32>
    %9 = vector.extract_strided_slice %6 {offsets = [1, 0], sizes = [1, 32], strides = [1, 1]} : vector<2x32xf32> to vector<1x32xf32>
    %10 = vector.shape_cast %9 : vector<1x32xf32> to vector<32xf32>
    %c0_9 = arith.constant 0 : index
    %c0_10 = arith.constant 0 : index
    %11 = vector.load %arg7[%c0_9, %c0_10] : memref<1x128xf32, #tpu.memory_space<vmem>>, vector<1x128xf32>
    %c0_11 = arith.constant 0 : index
    %c0_12 = arith.constant 0 : index
    %12 = vector.load %arg6[%c0_11, %c0_12] : memref<32x128xbf16, #tpu.memory_space<vmem>>, vector<32x128xbf16>
    %13 = arith.addf %1, %3 : vector<32x32xf32>
    %14 = arith.truncf %13 : vector<32x32xf32> to vector<32x32xbf16>
    %c0_13 = arith.constant 0 : index
    %c0_14 = arith.constant 0 : index
    %c0_15 = arith.constant 0 : index
    %15 = vector.load %arg4[%c0_13, %c0_14, %c0_15] : memref<2x32x32xbf16, #tpu.memory_space<vmem>>, vector<1x32x32xbf16>
    %16 = vector.shape_cast %15 : vector<1x32x32xbf16> to vector<32x32xbf16>
    %cst = arith.constant dense<0.000000e+00> : vector<32x32xf32>
    %17 = tpu.matmul %14, %16, %cst {dimension_numbers = #tpu.dot_dimension_numbers<[1], [0], [0], [1], [0, 0, 1, 1], [], []>} : vector<32x32xbf16>, vector<32x32xbf16>, vector<32x32xf32> -> vector<32x32xf32>
    %18 = vector.shape_cast %8 : vector<32xf32> to vector<1x32xf32>
    %19 = vector.broadcast %18 : vector<1x32xf32> to vector<32x32xf32>
    %20 = arith.addf %17, %19 : vector<32x32xf32>
    %21 = math.tanh %20 : vector<32x32xf32>
    %22 = arith.mulf %21, %21 : vector<32x32xf32>
    %cst_16 = arith.constant 1.000000e+00 : f32
    %23 = vector.broadcast %cst_16 : f32 to vector<32x32xf32>
    %24 = arith.subf %23, %22 : vector<32x32xf32>
    %25 = arith.truncf %24 : vector<32x32xf32> to vector<32x32xbf16>
    %26 = arith.truncf %21 : vector<32x32xf32> to vector<32x32xbf16>
    %c1 = arith.constant 1 : index
    %c0_17 = arith.constant 0 : index
    %c0_18 = arith.constant 0 : index
    %27 = vector.load %arg4[%c1, %c0_17, %c0_18] : memref<2x32x32xbf16, #tpu.memory_space<vmem>>, vector<1x32x32xbf16>
    %28 = vector.shape_cast %27 : vector<1x32x32xbf16> to vector<32x32xbf16>
    %cst_19 = arith.constant dense<0.000000e+00> : vector<32x32xf32>
    %29 = tpu.matmul %26, %28, %cst_19 {dimension_numbers = #tpu.dot_dimension_numbers<[1], [0], [0], [1], [0, 0, 1, 1], [], []>} : vector<32x32xbf16>, vector<32x32xbf16>, vector<32x32xf32> -> vector<32x32xf32>
    %30 = vector.shape_cast %10 : vector<32xf32> to vector<1x32xf32>
    %31 = vector.broadcast %30 : vector<1x32xf32> to vector<32x32xf32>
    %32 = arith.addf %29, %31 : vector<32x32xf32>
    %33 = math.tanh %32 : vector<32x32xf32>
    %34 = arith.mulf %33, %33 : vector<32x32xf32>
    %cst_20 = arith.constant 1.000000e+00 : f32
    %35 = vector.broadcast %cst_20 : f32 to vector<32x32xf32>
    %36 = arith.subf %35, %34 : vector<32x32xf32>
    %37 = arith.truncf %36 : vector<32x32xf32> to vector<32x32xbf16>
    %38 = arith.truncf %33 : vector<32x32xf32> to vector<32x32xbf16>
    %cst_21 = arith.constant dense<0.000000e+00> : vector<32x128xf32>
    %39 = tpu.matmul %38, %12, %cst_21 {dimension_numbers = #tpu.dot_dimension_numbers<[1], [0], [0], [1], [0, 0, 1, 1], [], []>} : vector<32x32xbf16>, vector<32x128xbf16>, vector<32x128xf32> -> vector<32x128xf32>
    %40 = vector.broadcast %11 : vector<1x128xf32> to vector<32x128xf32>
    %41 = arith.addf %39, %40 : vector<32x128xf32>
    %42 = arith.subf %41, %5 : vector<32x128xf32>
    %43 = arith.truncf %42 : vector<32x128xf32> to vector<32x128xbf16>
    %cst_22 = arith.constant dense<0.000000e+00> : vector<32x32xf32>
    %44 = tpu.matmul %43, %12, %cst_22 {dimension_numbers = #tpu.dot_dimension_numbers<[1], [1], [0], [0], [0, 0, 1, 0], [], []>} : vector<32x128xbf16>, vector<32x128xbf16>, vector<32x32xf32> -> vector<32x32xf32>
    %45 = arith.extf %37 : vector<32x32xbf16> to vector<32x32xf32>
    %46 = arith.mulf %44, %45 : vector<32x32xf32>
    %47 = arith.truncf %46 : vector<32x32xf32> to vector<32x32xbf16>
    %c1_23 = arith.constant 1 : index
    %c0_24 = arith.constant 0 : index
    %c0_25 = arith.constant 0 : index
    %48 = vector.load %arg4[%c1_23, %c0_24, %c0_25] : memref<2x32x32xbf16, #tpu.memory_space<vmem>>, vector<1x32x32xbf16>
    %49 = vector.shape_cast %48 : vector<1x32x32xbf16> to vector<32x32xbf16>
    %cst_26 = arith.constant dense<0.000000e+00> : vector<32x32xf32>
    %50 = tpu.matmul %47, %49, %cst_26 {dimension_numbers = #tpu.dot_dimension_numbers<[1], [1], [0], [0], [0, 0, 1, 0], [], []>} : vector<32x32xbf16>, vector<32x32xbf16>, vector<32x32xf32> -> vector<32x32xf32>
    %51 = arith.extf %25 : vector<32x32xbf16> to vector<32x32xf32>
    %52 = arith.mulf %50, %51 : vector<32x32xf32>
    %53 = arith.truncf %52 : vector<32x32xf32> to vector<32x32xbf16>
    %c0_27 = arith.constant 0 : index
    %c0_28 = arith.constant 0 : index
    %c0_29 = arith.constant 0 : index
    %54 = vector.load %arg4[%c0_27, %c0_28, %c0_29] : memref<2x32x32xbf16, #tpu.memory_space<vmem>>, vector<1x32x32xbf16>
    %55 = vector.shape_cast %54 : vector<1x32x32xbf16> to vector<32x32xbf16>
    %cst_30 = arith.constant dense<0.000000e+00> : vector<32x32xf32>
    %56 = tpu.matmul %53, %55, %cst_30 {dimension_numbers = #tpu.dot_dimension_numbers<[1], [1], [0], [0], [0, 0, 1, 0], [], []>} : vector<32x32xbf16>, vector<32x32xbf16>, vector<32x32xf32> -> vector<32x32xf32>
    %cst_31 = arith.constant 1.78571427E-5 : f32
    %57 = vector.broadcast %cst_31 : f32 to vector<32x32xf32>
    %58 = arith.mulf %57, %56 : vector<32x32xf32>
    %59 = arith.addf %3, %58 : vector<32x32xf32>
    %60 = math.absf %59 : vector<32x32xf32>
    %cst_32 = arith.constant dense<0xFF800000> : vector<32xf32>
    %61 = vector.multi_reduction <maximumf>, %60, %cst_32 [1] : vector<32x32xf32> to vector<32xf32>
    %62 = vector.shape_cast %61 : vector<32xf32> to vector<32x1xf32>
    %cst_33 = arith.constant 9.99999997E-7 : f32
    %63 = vector.broadcast %cst_33 : f32 to vector<32x1xf32>
    %64 = arith.addf %62, %63 : vector<32x1xf32>
    %65 = tpu.reciprocal %64 {approx = true} : vector<32x1xf32> -> vector<32x1xf32>
    %66 = vector.broadcast %65 : vector<32x1xf32> to vector<32x32xf32>
    %67 = arith.mulf %59, %66 : vector<32x32xf32>
    %68 = arith.addf %1, %67 : vector<32x32xf32>
    %69 = arith.truncf %68 : vector<32x32xf32> to vector<32x32xbf16>
    %c0_34 = arith.constant 0 : index
    %c0_35 = arith.constant 0 : index
    %c0_36 = arith.constant 0 : index
    %70 = vector.load %arg4[%c0_34, %c0_35, %c0_36] : memref<2x32x32xbf16, #tpu.memory_space<vmem>>, vector<1x32x32xbf16>
    %71 = vector.shape_cast %70 : vector<1x32x32xbf16> to vector<32x32xbf16>
    %cst_37 = arith.constant dense<0.000000e+00> : vector<32x32xf32>
    %72 = tpu.matmul %69, %71, %cst_37 {dimension_numbers = #tpu.dot_dimension_numbers<[1], [0], [0], [1], [0, 0, 1, 1], [], []>} : vector<32x32xbf16>, vector<32x32xbf16>, vector<32x32xf32> -> vector<32x32xf32>
    %73 = vector.shape_cast %8 : vector<32xf32> to vector<1x32xf32>
    %74 = vector.broadcast %73 : vector<1x32xf32> to vector<32x32xf32>
    %75 = arith.addf %72, %74 : vector<32x32xf32>
    %76 = math.tanh %75 : vector<32x32xf32>
    %77 = arith.truncf %76 : vector<32x32xf32> to vector<32x32xbf16>
    %c1_38 = arith.constant 1 : index
    %c0_39 = arith.constant 0 : index
    %c0_40 = arith.constant 0 : index
    %78 = vector.load %arg4[%c1_38, %c0_39, %c0_40] : memref<2x32x32xbf16, #tpu.memory_space<vmem>>, vector<1x32x32xbf16>
    %79 = vector.shape_cast %78 : vector<1x32x32xbf16> to vector<32x32xbf16>
    %cst_41 = arith.constant dense<0.000000e+00> : vector<32x32xf32>
    %80 = tpu.matmul %77, %79, %cst_41 {dimension_numbers = #tpu.dot_dimension_numbers<[1], [0], [0], [1], [0, 0, 1, 1], [], []>} : vector<32x32xbf16>, vector<32x32xbf16>, vector<32x32xf32> -> vector<32x32xf32>
    %81 = vector.shape_cast %10 : vector<32xf32> to vector<1x32xf32>
    %82 = vector.broadcast %81 : vector<1x32xf32> to vector<32x32xf32>
    %83 = arith.addf %80, %82 : vector<32x32xf32>
    %84 = math.tanh %83 : vector<32x32xf32>
    %85 = arith.truncf %84 : vector<32x32xf32> to vector<32x32xbf16>
    %cst_42 = arith.constant dense<0.000000e+00> : vector<32x128xf32>
    %86 = tpu.matmul %85, %12, %cst_42 {dimension_numbers = #tpu.dot_dimension_numbers<[1], [0], [0], [1], [0, 0, 1, 1], [], []>} : vector<32x32xbf16>, vector<32x128xbf16>, vector<32x128xf32> -> vector<32x128xf32>
    %87 = vector.broadcast %11 : vector<1x128xf32> to vector<32x128xf32>
    %88 = arith.addf %86, %87 : vector<32x128xf32>
    %89 = arith.subf %88, %5 : vector<32x128xf32>
    %90 = arith.mulf %89, %89 : vector<32x128xf32>
    %91 = vector.shape_cast %90 : vector<32x128xf32> to vector<2x16x128xf32>
    %92 = tpu.iota {dimensions = array<i32: 0>} : vector<16x1xi32>
    %c16_i32 = arith.constant 16 : i32
    %93 = arith.muli %arg0, %c16_i32 : i32
    %94 = vector.broadcast %93 : i32 to vector<16x1xi32>
    %95 = arith.addi %94, %92 : vector<16x1xi32>
    %c14_i32 = arith.constant 14 : i32
    %96 = vector.broadcast %c14_i32 : i32 to vector<16x1xi32>
    %97 = arith.cmpi slt, %95, %96 : vector<16x1xi32>
    %98 = arith.extui %97 : vector<16x1xi1> to vector<16x1xi32>
    %99 = arith.sitofp %98 : vector<16x1xi32> to vector<16x1xf32>
    %100 = vector.shape_cast %99 : vector<16x1xf32> to vector<1x16x1xf32>
    %101 = vector.broadcast %100 : vector<1x16x1xf32> to vector<2x16x128xf32>
    %102 = arith.mulf %91, %101 : vector<2x16x128xf32>
    %cst_43 = arith.constant dense<0.000000e+00> : vector<2x128xf32>
    %103 = vector.multi_reduction <add>, %102, %cst_43 [1] : vector<2x16x128xf32> to vector<2x128xf32>
    %104 = vector.shape_cast %103 : vector<2x128xf32> to vector<1x2x128xf32>
    %c0_44 = arith.constant 0 : index
    %c0_45 = arith.constant 0 : index
    %c0_46 = arith.constant 0 : index
    %105 = vector.load %arg8[%c0_44, %c0_45, %c0_46] : memref<1x2x128xf32, #tpu.memory_space<vmem>>, vector<1x2x128xf32>
    tpu.vector_store %arg8[%c0_44, %c0_45, %c0_46], %104 {strides = array<i32>} : memref<1x2x128xf32, #tpu.memory_space<vmem>>, vector<1x2x128xf32>,
    return
  }
  func.func @transform_0(%arg0: i32) -> (i32, i32) {
    %c0_i32 = arith.constant 0 : i32
    %c0_i32_0 = arith.constant 0 : i32
    return %arg0, %c0_i32 : i32, i32
  }
  func.func @transform_1(%arg0: i32) -> (i32, i32, i32) {
    %c0_i32 = arith.constant 0 : i32
    %c0_i32_0 = arith.constant 0 : i32
    %c0_i32_1 = arith.constant 0 : i32
    return %c0_i32, %arg0, %c0_i32_0 : i32, i32, i32
  }
  func.func @transform_2(%arg0: i32) -> (i32, i32, i32) {
    %c0_i32 = arith.constant 0 : i32
    %c0_i32_0 = arith.constant 0 : i32
    %c0_i32_1 = arith.constant 0 : i32
    return %c0_i32, %arg0, %c0_i32_0 : i32, i32, i32
  }
  func.func @transform_3(%arg0: i32) -> (i32, i32, i32) {
    %c0_i32 = arith.constant 0 : i32
    %c0_i32_0 = arith.constant 0 : i32
    %c0_i32_1 = arith.constant 0 : i32
    %c0_i32_2 = arith.constant 0 : i32
    return %c0_i32, %c0_i32_0, %c0_i32_1 : i32, i32, i32
  }
  func.func @transform_4(%arg0: i32) -> (i32, i32) {
    %c0_i32 = arith.constant 0 : i32
    %c0_i32_0 = arith.constant 0 : i32
    %c0_i32_1 = arith.constant 0 : i32
    return %c0_i32, %c0_i32_0 : i32, i32
  }
  func.func @transform_5(%arg0: i32) -> (i32, i32) {
    %c0_i32 = arith.constant 0 : i32
    %c0_i32_0 = arith.constant 0 : i32
    %c0_i32_1 = arith.constant 0 : i32
    return %c0_i32, %c0_i32_0 : i32, i32
  }
  func.func @transform_6(%arg0: i32) -> (i32, i32) {
    %c0_i32 = arith.constant 0 : i32
    %c0_i32_0 = arith.constant 0 : i32
    %c0_i32_1 = arith.constant 0 : i32
    return %c0_i32, %c0_i32_0 : i32, i32
  }
  func.func @transform_7(%arg0: i32) -> (i32, i32, i32) {
    %c0_i32 = arith.constant 0 : i32
    %c0_i32_0 = arith.constant 0 : i32
    %c0_i32_1 = arith.constant 0 : i32
    return %arg0, %c0_i32, %c0_i32_0 : i32, i32, i32
  }
}

</mosaic_0001>

<llo_original>
// kernel: tpu_custom_call.1
$region0: #{tpu_custom_call.1}
  #allocation0 [shape = 'u32[]', space=smem, size = 0x4, offset = 0x4, fixed_abs, tag = 'smem constant byte address 0x4 - core index']
  #allocation1 [shape = 'u32[144,128]{1,0:T(1,128)}', space=vmem, size = 0x12000, scoped, tag = 'internal scratch']
  %s0 = inlined_call_operand.hbm [shape: f32[16,32], index: 0, kind: input, shape index: {}]
  %s1 = inlined_call_operand.hbm [shape: f32[2,16,32], index: 1, kind: input, shape index: {}]
  %s2 = inlined_call_operand.hbm [shape: f32[2,16,128], index: 2, kind: input, shape index: {}]
  %s3 = inlined_call_operand.hbm [shape: bf16[2,32,32], index: 3, kind: input, shape index: {}]
  %s4 = inlined_call_operand.vmem [shape: f32[2,32], index: 4, kind: input, shape index: {}]
  %s5 = inlined_call_operand.vmem [shape: bf16[32,128], index: 5, kind: input, shape index: {}]
  %s6 = inlined_call_operand.vmem [shape: f32[1,128], index: 6, kind: input, shape index: {}]
  %s7 = inlined_call_operand.hbm [shape: f32[1,2,128], index: 7, kind: output, shape index: {}]
  %s8 = sld [smem:[#allocation0]]
  $region54: #{tpu_custom_call.1} parent=0
    _
  %s10 = ssub.s32 1, %s8
  %s11 = scalar_select 0, %s10, %s8
  $region1: #{tpu_custom_call.1} parent=0
    #allocation2 [shape = 'u8[8192]{0}', space=vmem, size = 0x2000, scoped, tag = 'input window, operand 0, single buffered']
    #allocation3 [shape = 's32[1]{0}', space=sflag, size = 0x4, scoped, tag = 'scoped memory for tpu_custom_call.1']
    #allocation4 [shape = 's32[1]{0}', space=sflag, size = 0x4, scoped, tag = 'scoped memory for tpu_custom_call.1']
    #allocation5 [shape = 'u8[16384]{0}', space=vmem, size = 0x4000, scoped, tag = 'input window, operand 1, single buffered']
    #allocation6 [shape = 's32[1]{0}', space=sflag, size = 0x4, scoped, tag = 'scoped memory for tpu_custom_call.1']
    #allocation7 [shape = 'u8[16384]{0}', space=vmem, size = 0x4000, scoped, tag = 'input window, operand 2, single buffered']
    #allocation8 [shape = 'u8[16384]{0}', space=vmem, size = 0x4000, scoped, tag = 'input window, operand 3, single buffered']
    #allocation9 [shape = 's32[1]{0}', space=sflag, size = 0x4, scoped, tag = 'scoped memory for tpu_custom_call.1']
    #allocation10 [shape = 'u8[1024]{0}', space=vmem, size = 0x400, scoped, tag = 'output window, operand 0, single buffered']
    %12 = vsyncpa [#allocation3], 0
    %13 = vsyncpa [#allocation6], 0
    %14 = vsyncpa [#allocation9], 0
    %15 = vsyncpa [#allocation4], 0
    // Predicated region
    $region2: #{tpu_custom_call.1} parent=1 // pred_check
      _
    $region3: #{tpu_custom_call.1} parent=1 // pred_check_branch
      %17 = sbr.rel (0) target = $region5
    $region4: #{tpu_custom_call.1} parent=1 // pred_region
      %s19 = ssub.s32 256, 256
      %20 = vsyncadd [#allocation3], %s19
      %s21 = sshll.u32 [#allocation2], 4
      %s22 = int_to_ptr.vmem [resolvable:$true] %s21
      %27 = dma.hbm_to_vmem [thread:$0]  %s0, 256, %s22, [#allocation3], 128, 128, 8
    $region5: #{tpu_custom_call.1} parent=1 // pred_fallthru
      _
    // Predicated region
    $region6: #{tpu_custom_call.1} parent=1 // pred_check
      _
    $region7: #{tpu_custom_call.1} parent=1 // pred_check_branch
      %29 = sbr.rel (0) target = $region9
    $region8: #{tpu_custom_call.1} parent=1 // pred_region
      %s31 = ssub.s32 512, 512
      %32 = vsyncadd [#allocation6], %s31
      %s33 = sshll.u32 [#allocation5], 4
      %s34 = int_to_ptr.vmem [resolvable:$true] %s33
      %39 = dma.hbm_to_vmem [thread:$0]  %s1, 512, %s34, [#allocation6], 128, 128, 8
    $region9: #{tpu_custom_call.1} parent=1 // pred_fallthru
      _
    // Predicated region
    $region10: #{tpu_custom_call.1} parent=1 // pred_check
      _
    $region11: #{tpu_custom_call.1} parent=1 // pred_check_branch
      %41 = sbr.rel (0) target = $region13
    $region12: #{tpu_custom_call.1} parent=1 // pred_region
      %s43 = ssub.s32 512, 512
      %44 = vsyncadd [#allocation6], %s43
      %s45 = sshll.u32 [#allocation7], 4
      %s46 = int_to_ptr.vmem [resolvable:$true] %s45
      %51 = dma.hbm_to_vmem [thread:$0]  %s2, 512, %s46, [#allocation6], 128, 128, 8
    $region13: #{tpu_custom_call.1} parent=1 // pred_fallthru
      _
    // Predicated region
    $region14: #{tpu_custom_call.1} parent=1 // pred_check
      _
    $region15: #{tpu_custom_call.1} parent=1 // pred_check_branch
      %53 = sbr.rel (0) target = $region17
    $region16: #{tpu_custom_call.1} parent=1 // pred_region
      %s55 = ssub.s32 512, 512
      %56 = vsyncadd [#allocation9], %s55
      %s57 = sshll.u32 [#allocation8], 4
      %s58 = int_to_ptr.vmem [resolvable:$true] %s57
      %63 = dma.hbm_to_vmem [thread:$0]  %s3, 512, %s58, [#allocation9], 64, 64, 4
    $region17: #{tpu_custom_call.1} parent=1 // pred_fallthru
      _
    // Predicated region
    $region18: #{tpu_custom_call.1} parent=1 // pred_check
      _
    $region19: #{tpu_custom_call.1} parent=1 // pred_check_branch
      %65 = sbr.rel (0) target = $region21
    $region20: #{tpu_custom_call.1} parent=1 // pred_region
      _
    $region21: #{tpu_custom_call.1} parent=1 // pred_fallthru
      _
    // Predicated region
    $region22: #{tpu_custom_call.1} parent=1 // pred_check
      _
    $region23: #{tpu_custom_call.1} parent=1 // pred_check_branch
      %67 = sbr.rel (0) target = $region25
    $region24: #{tpu_custom_call.1} parent=1 // pred_region
      _
    $region25: #{tpu_custom_call.1} parent=1 // pred_fallthru
      _
    // Predicated region
    $region26: #{tpu_custom_call.1} parent=1 // pred_check
      _
    $region27: #{tpu_custom_call.1} parent=1 // pred_check_branch
      %69 = sbr.rel (0) target = $region29
    $region28: #{tpu_custom_call.1} parent=1 // pred_region
      _
    $region29: #{tpu_custom_call.1} parent=1 // pred_fallthru
      _
    // Predicated region
    $region30: #{tpu_custom_call.1} parent=1 // pred_check
      _
    $region31: #{tpu_custom_call.1} parent=1 // pred_check_branch
      %71 = sbr.rel (0) target = $region33
    $region32: #{tpu_custom_call.1} parent=1 // pred_region
      %72 = dma.done [#allocation3], 256
    $region33: #{tpu_custom_call.1} parent=1 // pred_fallthru
      _
    // Predicated region
    $region34: #{tpu_custom_call.1} parent=1 // pred_check
      _
    $region35: #{tpu_custom_call.1} parent=1 // pred_check_branch
      %74 = sbr.rel (0) target = $region37
    $region36: #{tpu_custom_call.1} parent=1 // pred_region
      %75 = dma.done [#allocation6], 512
    $region37: #{tpu_custom_call.1} parent=1 // pred_fallthru
      _
    // Predicated region
    $region38: #{tpu_custom_call.1} parent=1 // pred_check
      _
    $region39: #{tpu_custom_call.1} parent=1 // pred_check_branch
      %77 = sbr.rel (0) target = $region41
    $region40: #{tpu_custom_call.1} parent=1 // pred_region
      %78 = dma.done [#allocation6], 512
    $region41: #{tpu_custom_call.1} parent=1 // pred_fallthru
      _
    // Predicated region
    $region42: #{tpu_custom_call.1} parent=1 // pred_check
      _
    $region43: #{tpu_custom_call.1} parent=1 // pred_check_branch
      %80 = sbr.rel (0) target = $region45
    $region44: #{tpu_custom_call.1} parent=1 // pred_region
      %81 = dma.done [#allocation9], 512
    $region45: #{tpu_custom_call.1} parent=1 // pred_fallthru
      _
    %v83 = vld [vmem:[#allocation2] sm:$0xff]
    %v84 = vld [vmem:[#allocation2 + $0x8] sm:$0xff]
    %v85 = vld [vmem:[#allocation5] sm:$0xff]
    %v86 = vld [vmem:[#allocation5 + $0x8] sm:$0xff]
    %v87 = vld [vmem:[#allocation5 + $0x10] sm:$0xff]
    %v88 = vld [vmem:[#allocation5 + $0x18] sm:$0xff]
    %v89 = vld [vmem:[#allocation7] sm:$0xff]
    %v90 = vld [vmem:[#allocation7 + $0x8] sm:$0xff]
    %v91 = vld [vmem:[#allocation7 + $0x10] sm:$0xff]
    %v92 = vld [vmem:[#allocation7 + $0x18] sm:$0xff]
    %v93 = vld [vmem:[%s4] sm:$0x3]
    %v94 = vld [vmem:[%s6] sm:$0x1]
    %v95 = vld [vmem:[%s5] sm:$0xf]
    %v96 = vld [vmem:[%s5 + $0x4] sm:$0xf]
    %v97 = vld [vmem:[%s5 + $0x8] sm:$0xf]
    %v98 = vld [vmem:[%s5 + $0xc] sm:$0xf]
    %v99 = vadd.f32 %v83, %v85
    %v100 = vadd.f32 %v84, %v86
    %v101 = vadd.f32 %v83, %v87
    %v102 = vadd.f32 %v84, %v88
    %v103 = vpack.c.bf16 %v100, %v99
    %v104 = vpack.c.bf16 %v102, %v101
    %v105 = vld [vmem:[#allocation8] sm:$0xf]
    %v106 = vld [vmem:[#allocation8 + $0x4] sm:$0xf]
    %v107 = vld [vmem:[#allocation8 + $0x8] sm:$0xf]
    %v108 = vld [vmem:[#allocation8 + $0xc] sm:$0xf]
    %v109 = vlaneseq
    %v110 = vshrl.u32 %v109, 7
    %v111 = vsub.s32 0, %v110
    %v112 = vrot.slane %v93, %v111
    %v117 = vunpack.c.l.b16 %v105
    %v118 = vunpack.c.l.b16 %v106
    %v119 = vunpack.c.l.b16 %v107
    %v120 = vunpack.c.l.b16 %v108
    %v121 = vpack.c.b16 %v118, %v117
    %v122 = vpack.c.b16 %v120, %v119
    %vm125 = vcmask 261120
    %v127 = vsel %vm125, %v103, 0
    %v130 = vsel %vm125, %v104, 0
    %132 = vmatprep.subr.bf16.mxu0 0
    %133 = vmatpush1.bf16.msra.mxu0 %v121
    %134 = vmatprep.subr.bf16.mxu0 0
    %135 = vmatpush1.bf16.msra.mxu0 %v122
    %136 = vmatprep.subr.bf16.mxu0 0
    %137 = vmatpush1.bf16.msra.mxu0 0
    %138 = vmatprep.subr.bf16.mxu0 0
    %139 = vmatpush1.bf16.msra.mxu0 0
    %140 = vmatprep.subr.bf16.mxu0 0
    %141 = vmatpush1.bf16.msra.mxu0 0
    %142 = vmatprep.subr.bf16.mxu0 0
    %143 = vmatpush1.bf16.msra.mxu0 0
    %144 = vmatprep.subr.bf16.mxu0 0
    %145 = vmatpush1.bf16.msra.mxu0 0
    %146 = vmatprep.subr.bf16.mxu0 0
    %147 = vmatpush1.bf16.msra.mxu0 0
    %148 = vmatprep.subr.bf16.mxu0 0
    %149 = vmatpush1.bf16.msra.mxu0 0
    %150 = vmatprep.subr.bf16.mxu0 0
    %151 = vmatpush1.bf16.msra.mxu0 0
    %152 = vmatprep.subr.bf16.mxu0 0
    %153 = vmatpush1.bf16.msra.mxu0 0
    %154 = vmatprep.subr.bf16.mxu0 0
    %155 = vmatpush1.bf16.msra.mxu0 0
    %156 = vmatprep.subr.bf16.mxu0 0
    %157 = vmatpush1.bf16.msra.mxu0 0
    %158 = vmatprep.subr.bf16.mxu0 0
    %159 = vmatpush1.bf16.msra.mxu0 0
    %160 = vmatprep.subr.bf16.mxu0 0
    %161 = vmatpush1.bf16.msra.mxu0 0
    %162 = vmatprep.subr.bf16.mxu0 0
    %163 = vmatpush1.bf16.msra.mxu0 0
    %164 = vmatprep.mubr.bf16.mxu0 0
    %165 = vmatmul.mubr.bf16.gmra.mrb[0].mxu0 %v127
    %v166 = vpop.f32.mrb[0].mxu0
    %v167 = vadd.f32 %v112, %v166
    %v168 = vpop.f32.mrb[0].mxu0
    %v169 = vpop.f32.mrb[0].mxu0
    %v170 = vadd.f32 %v112, %v169
    %v171 = vpop.f32.mrb[0].mxu0
    %172 = vmatprep.mubr.bf16.mxu0 0
    %173 = vmatmul.mubr.bf16.gmra.mrb[0].mxu0 %v130
    %v174 = vpop.f32.mrb[0].mxu0
    %v175 = vadd.f32 %v112, %v174
    %v176 = vpop.f32.mrb[0].mxu0
    %v177 = vpop.f32.mrb[0].mxu0
    %v178 = vadd.f32 %v112, %v177
    %v179 = vpop.f32.mrb[0].mxu0
    %180 = vdwg.mxu0
    %v181 = vtanh.pop %v167
    %v182 = vtanh.pop %v170
    %v183 = vtanh.pop %v175
    %v184 = vtanh.pop %v178
    %v185 = vmul.f32 %v181, %v181
    %v186 = vmul.f32 %v182, %v182
    %v187 = vmul.f32 %v183, %v183
    %v188 = vmul.f32 %v184, %v184
    %v189 = vsub.f32 1.0, %v185
    %v190 = vsub.f32 1.0, %v186
    %v191 = vsub.f32 1.0, %v187
    %v192 = vsub.f32 1.0, %v188
    %v193 = vpack.c.bf16 %v190, %v189
    %v194 = vpack.c.bf16 %v192, %v191
    %v195 = vpack.c.bf16 %v182, %v181
    %v196 = vpack.c.bf16 %v184, %v183
    %s197 = scalar_lea.vmem [#allocation8], 16
    %v198 = vld [vmem:[%s197] sm:$0xf]
    %v199 = vld [vmem:[%s197 + $0x4] sm:$0xf]
    %v200 = vld [vmem:[%s197 + $0x8] sm:$0xf]
    %v201 = vld [vmem:[%s197 + $0xc] sm:$0xf]
    %v202 = vlaneseq
    %v203 = vshrl.u32 %v202, 7
    %v204 = vsub.s32 1, %v203
    %v205 = vrot.slane %v93, %v204
    %v210 = vunpack.c.l.b16 %v198
    %v211 = vunpack.c.l.b16 %v199
    %v212 = vunpack.c.l.b16 %v200
    %v213 = vunpack.c.l.b16 %v201
    %v214 = vpack.c.b16 %v211, %v210
    %v215 = vpack.c.b16 %v213, %v212
    %v219 = vsel %vm125, %v195, 0
    %v222 = vsel %vm125, %v196, 0
    %224 = vmatprep.subr.bf16.mxu0 0
    %225 = vmatpush1.bf16.msra.mxu0 %v214
    %226 = vmatprep.subr.bf16.mxu0 0
    %227 = vmatpush1.bf16.msra.mxu0 %v215
    %228 = vmatprep.subr.bf16.mxu0 0
    %229 = vmatpush1.bf16.msra.mxu0 0
    %230 = vmatprep.subr.bf16.mxu0 0
    %231 = vmatpush1.bf16.msra.mxu0 0
    %232 = vmatprep.subr.bf16.mxu0 0
    %233 = vmatpush1.bf16.msra.mxu0 0
    %234 = vmatprep.subr.bf16.mxu0 0
    %235 = vmatpush1.bf16.msra.mxu0 0
    %236 = vmatprep.subr.bf16.mxu0 0
    %237 = vmatpush1.bf16.msra.mxu0 0
    %238 = vmatprep.subr.bf16.mxu0 0
    %239 = vmatpush1.bf16.msra.mxu0 0
    %240 = vmatprep.subr.bf16.mxu0 0
    %241 = vmatpush1.bf16.msra.mxu0 0
    %242 = vmatprep.subr.bf16.mxu0 0
    %243 = vmatpush1.bf16.msra.mxu0 0
    %244 = vmatprep.subr.bf16.mxu0 0
    %245 = vmatpush1.bf16.msra.mxu0 0
    %246 = vmatprep.subr.bf16.mxu0 0
    %247 = vmatpush1.bf16.msra.mxu0 0
    %248 = vmatprep.subr.bf16.mxu0 0
    %249 = vmatpush1.bf16.msra.mxu0 0
    %250 = vmatprep.subr.bf16.mxu0 0
    %251 = vmatpush1.bf16.msra.mxu0 0
    %252 = vmatprep.subr.bf16.mxu0 0
    %253 = vmatpush1.bf16.msra.mxu0 0
    %254 = vmatprep.subr.bf16.mxu0 0
    %255 = vmatpush1.bf16.msra.mxu0 0
    %256 = vmatprep.mubr.bf16.mxu0 0
    %257 = vmatmul.mubr.bf16.gmra.mrb[0].mxu0 %v219
    %v258 = vpop.f32.mrb[0].mxu0
    %v259 = vadd.f32 %v205, %v258
    %v260 = vpop.f32.mrb[0].mxu0
    %v261 = vpop.f32.mrb[0].mxu0
    %v262 = vadd.f32 %v205, %v261
    %v263 = vpop.f32.mrb[0].mxu0
    %264 = vmatprep.mubr.bf16.mxu0 0
    %265 = vmatmul.mubr.bf16.gmra.mrb[0].mxu0 %v222
    %v266 = vpop.f32.mrb[0].mxu0
    %v267 = vadd.f32 %v205, %v266
    %v268 = vpop.f32.mrb[0].mxu0
    %v269 = vpop.f32.mrb[0].mxu0
    %v270 = vadd.f32 %v205, %v269
    %v271 = vpop.f32.mrb[0].mxu0
    %272 = vdwg.mxu0
    %v273 = vtanh.pop %v259
    %v274 = vtanh.pop %v262
    %v275 = vtanh.pop %v267
    %v276 = vtanh.pop %v270
    %v277 = vmul.f32 %v273, %v273
    %v278 = vmul.f32 %v274, %v274
    %v279 = vmul.f32 %v275, %v275
    %v280 = vmul.f32 %v276, %v276
    %v281 = vsub.f32 1.0, %v277
    %v282 = vsub.f32 1.0, %v278
    %v283 = vsub.f32 1.0, %v279
    %v284 = vsub.f32 1.0, %v280
    %v285 = vpack.c.bf16 %v282, %v281
    %v286 = vpack.c.bf16 %v284, %v283
    %v287 = vpack.c.bf16 %v274, %v273
    %v288 = vpack.c.bf16 %v276, %v275
    %v290 = vlaneseq
    %v291 = vshrl.u32 %v290, 7
    %v292 = vsub.s32 0, %v291
    %v293 = vrot.slane %v94, %v292
    %v299 = vunpack.c.l.b16 %v95
    %v300 = vunpack.c.l.b16 %v96
    %v301 = vunpack.c.l.b16 %v97
    %v302 = vunpack.c.l.b16 %v98
    %v303 = vpack.c.b16 %v300, %v299
    %v304 = vpack.c.b16 %v302, %v301
    %v308 = vsel %vm125, %v287, 0
    %v311 = vsel %vm125, %v288, 0
    %313 = vmatprep.subr.bf16.mxu0 0
    %314 = vmatpush1.bf16.msra.mxu0 %v303
    %315 = vmatprep.subr.bf16.mxu0 0
    %316 = vmatpush1.bf16.msra.mxu0 %v304
    %317 = vmatprep.subr.bf16.mxu0 0
    %318 = vmatpush1.bf16.msra.mxu0 0
    %319 = vmatprep.subr.bf16.mxu0 0
    %320 = vmatpush1.bf16.msra.mxu0 0
    %321 = vmatprep.subr.bf16.mxu0 0
    %322 = vmatpush1.bf16.msra.mxu0 0
    %323 = vmatprep.subr.bf16.mxu0 0
    %324 = vmatpush1.bf16.msra.mxu0 0
    %325 = vmatprep.subr.bf16.mxu0 0
    %326 = vmatpush1.bf16.msra.mxu0 0
    %327 = vmatprep.subr.bf16.mxu0 0
    %328 = vmatpush1.bf16.msra.mxu0 0
    %329 = vmatprep.subr.bf16.mxu0 0
    %330 = vmatpush1.bf16.msra.mxu0 0
    %331 = vmatprep.subr.bf16.mxu0 0
    %332 = vmatpush1.bf16.msra.mxu0 0
    %333 = vmatprep.subr.bf16.mxu0 0
    %334 = vmatpush1.bf16.msra.mxu0 0
    %335 = vmatprep.subr.bf16.mxu0 0
    %336 = vmatpush1.bf16.msra.mxu0 0
    %337 = vmatprep.subr.bf16.mxu0 0
    %338 = vmatpush1.bf16.msra.mxu0 0
    %339 = vmatprep.subr.bf16.mxu0 0
    %340 = vmatpush1.bf16.msra.mxu0 0
    %341 = vmatprep.subr.bf16.mxu0 0
    %342 = vmatpush1.bf16.msra.mxu0 0
    %343 = vmatprep.subr.bf16.mxu0 0
    %344 = vmatpush1.bf16.msra.mxu0 0
    %345 = vmatprep.mubr.bf16.mxu0 0
    %346 = vmatmul.mubr.bf16.gmra.mrb[0].mxu0 %v308
    %v347 = vpop.f32.mrb[0].mxu0
    %v348 = vadd.f32 %v293, %v347
    %v349 = vpop.f32.mrb[0].mxu0
    %v350 = vpop.f32.mrb[0].mxu0
    %v351 = vadd.f32 %v293, %v350
    %v352 = vpop.f32.mrb[0].mxu0
    %353 = vmatprep.mubr.bf16.mxu0 0
    %354 = vmatmul.mubr.bf16.gmra.mrb[0].mxu0 %v311
    %v355 = vpop.f32.mrb[0].mxu0
    %v356 = vadd.f32 %v293, %v355
    %v357 = vpop.f32.mrb[0].mxu0
    %v358 = vpop.f32.mrb[0].mxu0
    %v359 = vadd.f32 %v293, %v358
    %v360 = vpop.f32.mrb[0].mxu0
    %361 = vdwg.mxu0
    %v362 = vsub.f32 %v348, %v89
    %v363 = vsub.f32 %v351, %v90
    %v364 = vsub.f32 %v356, %v91
    %v365 = vsub.f32 %v359, %v92
    %v366 = vpack.c.bf16 %v363, %v362
    %v367 = vpack.c.bf16 %v365, %v364
    %368 = vmatprep.subr.bf16.mxu0 0
    %369 = vmatpush1.bf16.xpose.msra.mxu0 %v303
    %370 = vmatprep.subr.bf16.mxu0 0
    %371 = vmatpush1.bf16.xpose.msra.mxu0 %v304
    %372 = vmatprep.subr.bf16.mxu0 0
    %373 = vmatpush1.bf16.xpose.msra.mxu0 0
    %374 = vmatprep.subr.bf16.mxu0 0
    %375 = vmatpush1.bf16.xpose.msra.mxu0 0
    %376 = vmatprep.subr.bf16.mxu0 0
    %377 = vmatpush1.bf16.xpose.msra.mxu0 0
    %378 = vmatprep.subr.bf16.mxu0 0
    %379 = vmatpush1.bf16.xpose.msra.mxu0 0
    %380 = vmatprep.subr.bf16.mxu0 0
    %381 = vmatpush1.bf16.xpose.msra.mxu0 0
    %382 = vmatprep.subr.bf16.mxu0 0
    %383 = vmatpush1.bf16.xpose.msra.mxu0 0
    %384 = vmatprep.subr.bf16.mxu0 0
    %385 = vmatpush1.bf16.xpose.msra.mxu0 0
    %386 = vmatprep.subr.bf16.mxu0 0
    %387 = vmatpush1.bf16.xpose.msra.mxu0 0
    %388 = vmatprep.subr.bf16.mxu0 0
    %389 = vmatpush1.bf16.xpose.msra.mxu0 0
    %390 = vmatprep.subr.bf16.mxu0 0
    %391 = vmatpush1.bf16.xpose.msra.mxu0 0
    %392 = vmatprep.subr.bf16.mxu0 0
    %393 = vmatpush1.bf16.xpose.msra.mxu0 0
    %394 = vmatprep.subr.bf16.mxu0 0
    %395 = vmatpush1.bf16.xpose.msra.mxu0 0
    %396 = vmatprep.subr.bf16.mxu0 0
    %397 = vmatpush1.bf16.xpose.msra.mxu0 0
    %398 = vmatprep.subr.bf16.mxu0 0
    %399 = vmatpush1.bf16.xpose.msra.mxu0 0
    %400 = vmatprep.mubr.bf16.mxu0 0
    %401 = vmatmul.mubr.bf16.gmra.mrb[0].mxu0 %v366
    %v402 = vpop.f32.mrb[0].mxu0
    %v403 = vadd.f32 0.0, %v402
    %v404 = vpop.f32.mrb[0].mxu0
    %v405 = vpop.f32.mrb[0].mxu0
    %v406 = vadd.f32 0.0, %v405
    %v407 = vpop.f32.mrb[0].mxu0
    %408 = vmatprep.mubr.bf16.mxu0 0
    %409 = vmatmul.mubr.bf16.gmra.mrb[0].mxu0 %v367
    %v410 = vpop.f32.mrb[0].mxu0
    %v411 = vadd.f32 0.0, %v410
    %v412 = vpop.f32.mrb[0].mxu0
    %v413 = vpop.f32.mrb[0].mxu0
    %v414 = vadd.f32 0.0, %v413
    %v415 = vpop.f32.mrb[0].mxu0
    %416 = vdwg.mxu0
    %v417 = vunpack.c.l.bf16 %v285
    %v418 = vunpack.c.h.bf16 %v285
    %v419 = vunpack.c.l.bf16 %v286
    %v420 = vunpack.c.h.bf16 %v286
    %v421 = vmul.f32 %v403, %v417
    %v422 = vmul.f32 %v406, %v418
    %v423 = vmul.f32 %v411, %v419
    %v424 = vmul.f32 %v414, %v420
    %v425 = vpack.c.bf16 %v422, %v421
    %v426 = vpack.c.bf16 %v424, %v423
    %v428 = vsel %vm125, %v425, 0
    %v431 = vsel %vm125, %v426, 0
    %v434 = vsel %vm125, %v214, 0
    %v437 = vsel %vm125, %v215, 0
    %439 = vmatprep.subr.bf16.mxu0 0
    %440 = vmatpush1.bf16.xpose.msra.mxu0 %v434
    %441 = vmatprep.subr.bf16.mxu0 0
    %442 = vmatpush1.bf16.xpose.msra.mxu0 %v437
    %443 = vmatprep.subr.bf16.mxu0 0
    %444 = vmatpush1.bf16.xpose.msra.mxu0 0
    %445 = vmatprep.subr.bf16.mxu0 0
    %446 = vmatpush1.bf16.xpose.msra.mxu0 0
    %447 = vmatprep.subr.bf16.mxu0 0
    %448 = vmatpush1.bf16.xpose.msra.mxu0 0
    %449 = vmatprep.subr.bf16.mxu0 0
    %450 = vmatpush1.bf16.xpose.msra.mxu0 0
    %451 = vmatprep.subr.bf16.mxu0 0
    %452 = vmatpush1.bf16.xpose.msra.mxu0 0
    %453 = vmatprep.subr.bf16.mxu0 0
    %454 = vmatpush1.bf16.xpose.msra.mxu0 0
    %455 = vmatprep.subr.bf16.mxu0 0
    %456 = vmatpush1.bf16.xpose.msra.mxu0 0
    %457 = vmatprep.subr.bf16.mxu0 0
    %458 = vmatpush1.bf16.xpose.msra.mxu0 0
    %459 = vmatprep.subr.bf16.mxu0 0
    %460 = vmatpush1.bf16.xpose.msra.mxu0 0
    %461 = vmatprep.subr.bf16.mxu0 0
    %462 = vmatpush1.bf16.xpose.msra.mxu0 0
    %463 = vmatprep.subr.bf16.mxu0 0
    %464 = vmatpush1.bf16.xpose.msra.mxu0 0
    %465 = vmatprep.subr.bf16.mxu0 0
    %466 = vmatpush1.bf16.xpose.msra.mxu0 0
    %467 = vmatprep.subr.bf16.mxu0 0
    %468 = vmatpush1.bf16.xpose.msra.mxu0 0
    %469 = vmatprep.subr.bf16.mxu0 0
    %470 = vmatpush1.bf16.xpose.msra.mxu0 0
    %471 = vmatprep.mubr.bf16.mxu0 0
    %472 = vmatmul.mubr.bf16.gmra.mrb[0].mxu0 %v428
    %v473 = vpop.f32.mrb[0].mxu0
    %v474 = vadd.f32 0.0, %v473
    %v475 = vpop.f32.mrb[0].mxu0
    %v476 = vpop.f32.mrb[0].mxu0
    %v477 = vadd.f32 0.0, %v476
    %v478 = vpop.f32.mrb[0].mxu0
    %479 = vmatprep.mubr.bf16.mxu0 0
    %480 = vmatmul.mubr.bf16.gmra.mrb[0].mxu0 %v431
    %v481 = vpop.f32.mrb[0].mxu0
    %v482 = vadd.f32 0.0, %v481
    %v483 = vpop.f32.mrb[0].mxu0
    %v484 = vpop.f32.mrb[0].mxu0
    %v485 = vadd.f32 0.0, %v484
    %v486 = vpop.f32.mrb[0].mxu0
    %487 = vdwg.mxu0
    %v488 = vunpack.c.l.bf16 %v193
    %v489 = vunpack.c.h.bf16 %v193
    %v490 = vunpack.c.l.bf16 %v194
    %v491 = vunpack.c.h.bf16 %v194
    %v492 = vmul.f32 %v474, %v488
    %v493 = vmul.f32 %v477, %v489
    %v494 = vmul.f32 %v482, %v490
    %v495 = vmul.f32 %v485, %v491
    %v496 = vpack.c.bf16 %v493, %v492
    %v497 = vpack.c.bf16 %v495, %v494
    %v499 = vsel %vm125, %v496, 0
    %v502 = vsel %vm125, %v497, 0
    %v505 = vsel %vm125, %v121, 0
    %v508 = vsel %vm125, %v122, 0
    %510 = vmatprep.subr.bf16.mxu0 0
    %511 = vmatpush1.bf16.xpose.msra.mxu0 %v505
    %512 = vmatprep.subr.bf16.mxu0 0
    %513 = vmatpush1.bf16.xpose.msra.mxu0 %v508
    %514 = vmatprep.subr.bf16.mxu0 0
    %515 = vmatpush1.bf16.xpose.msra.mxu0 0
    %516 = vmatprep.subr.bf16.mxu0 0
    %517 = vmatpush1.bf16.xpose.msra.mxu0 0
    %518 = vmatprep.subr.bf16.mxu0 0
    %519 = vmatpush1.bf16.xpose.msra.mxu0 0
    %520 = vmatprep.subr.bf16.mxu0 0
    %521 = vmatpush1.bf16.xpose.msra.mxu0 0
    %522 = vmatprep.subr.bf16.mxu0 0
    %523 = vmatpush1.bf16.xpose.msra.mxu0 0
    %524 = vmatprep.subr.bf16.mxu0 0
    %525 = vmatpush1.bf16.xpose.msra.mxu0 0
    %526 = vmatprep.subr.bf16.mxu0 0
    %527 = vmatpush1.bf16.xpose.msra.mxu0 0
    %528 = vmatprep.subr.bf16.mxu0 0
    %529 = vmatpush1.bf16.xpose.msra.mxu0 0
    %530 = vmatprep.subr.bf16.mxu0 0
    %531 = vmatpush1.bf16.xpose.msra.mxu0 0
    %532 = vmatprep.subr.bf16.mxu0 0
    %533 = vmatpush1.bf16.xpose.msra.mxu0 0
    %534 = vmatprep.subr.bf16.mxu0 0
    %535 = vmatpush1.bf16.xpose.msra.mxu0 0
    %536 = vmatprep.subr.bf16.mxu0 0
    %537 = vmatpush1.bf16.xpose.msra.mxu0 0
    %538 = vmatprep.subr.bf16.mxu0 0
    %539 = vmatpush1.bf16.xpose.msra.mxu0 0
    %540 = vmatprep.subr.bf16.mxu0 0
    %541 = vmatpush1.bf16.xpose.msra.mxu0 0
    %542 = vmatprep.mubr.bf16.mxu0 0
    %543 = vmatmul.mubr.bf16.gmra.mrb[0].mxu0 %v499
    %v544 = vpop.f32.mrb[0].mxu0
    %v545 = vadd.f32 0.0, %v544
    %v546 = vpop.f32.mrb[0].mxu0
    %v547 = vpop.f32.mrb[0].mxu0
    %v548 = vadd.f32 0.0, %v547
    %v549 = vpop.f32.mrb[0].mxu0
    %550 = vmatprep.mubr.bf16.mxu0 0
    %551 = vmatmul.mubr.bf16.gmra.mrb[0].mxu0 %v502
    %v552 = vpop.f32.mrb[0].mxu0
    %v553 = vadd.f32 0.0, %v552
    %v554 = vpop.f32.mrb[0].mxu0
    %v555 = vpop.f32.mrb[0].mxu0
    %v556 = vadd.f32 0.0, %v555
    %v557 = vpop.f32.mrb[0].mxu0
    %558 = vdwg.mxu0
    %v559 = vmul.f32 %v545, 1.7857143e-05
    %v560 = vmul.f32 %v548, 1.7857143e-05
    %v561 = vmul.f32 %v553, 1.7857143e-05
    %v562 = vmul.f32 %v556, 1.7857143e-05
    %v563 = vadd.f32 %v85, %v559
    %v564 = vadd.f32 %v86, %v560
    %v565 = vadd.f32 %v87, %v561
    %v566 = vadd.f32 %v88, %v562
    %v567 = vand.u32 2147483647, %v563
    %v568 = vand.u32 2147483647, %v564
    %v569 = vand.u32 2147483647, %v565
    %v570 = vand.u32 2147483647, %v566
    %v571 = vsel %vm125, %v567, -inf
    %572 = vmax.xlane.f32.xlu0 %v571
    %v573 = vpop.xlane.xlu0 %572
    %v574 = vsel %vm125, %v568, -inf
    %575 = vmax.xlane.f32.xlu0 %v574
    %v576 = vpop.xlane.xlu0 %575
    %v577 = vsel %vm125, %v569, -inf
    %578 = vmax.xlane.f32.xlu0 %v577
    %v579 = vpop.xlane.xlu0 %578
    %v580 = vsel %vm125, %v570, -inf
    %581 = vmax.xlane.f32.xlu0 %v580
    %v582 = vpop.xlane.xlu0 %581
    %v583 = vadd.f32 %v573, 1e-06
    %v584 = vadd.f32 %v576, 1e-06
    %v585 = vadd.f32 %v579, 1e-06
    %v586 = vadd.f32 %v582, 1e-06
    %v587 = vrcp.pop %v583
    %v588 = vrcp.pop %v584
    %v589 = vrcp.pop %v585
    %v590 = vrcp.pop %v586
    %v591 = vmul.f32 %v563, %v587
    %v592 = vmul.f32 %v564, %v588
    %v593 = vmul.f32 %v565, %v589
    %v594 = vmul.f32 %v566, %v590
    %v595 = vadd.f32 %v83, %v591
    %v596 = vadd.f32 %v84, %v592
    %v597 = vadd.f32 %v83, %v593
    %v598 = vadd.f32 %v84, %v594
    %v599 = vpack.c.bf16 %v596, %v595
    %v600 = vpack.c.bf16 %v598, %v597
    %v602 = vsel %vm125, %v599, 0
    %v605 = vsel %vm125, %v600, 0
    %607 = vmatprep.subr.bf16.mxu0 0
    %608 = vmatpush1.bf16.msra.mxu0 %v121
    %609 = vmatprep.subr.bf16.mxu0 0
    %610 = vmatpush1.bf16.msra.mxu0 %v122
    %611 = vmatprep.subr.bf16.mxu0 0
    %612 = vmatpush1.bf16.msra.mxu0 0
    %613 = vmatprep.subr.bf16.mxu0 0
    %614 = vmatpush1.bf16.msra.mxu0 0
    %615 = vmatprep.subr.bf16.mxu0 0
    %616 = vmatpush1.bf16.msra.mxu0 0
    %617 = vmatprep.subr.bf16.mxu0 0
    %618 = vmatpush1.bf16.msra.mxu0 0
    %619 = vmatprep.subr.bf16.mxu0 0
    %620 = vmatpush1.bf16.msra.mxu0 0
    %621 = vmatprep.subr.bf16.mxu0 0
    %622 = vmatpush1.bf16.msra.mxu0 0
    %623 = vmatprep.subr.bf16.mxu0 0
    %624 = vmatpush1.bf16.msra.mxu0 0
    %625 = vmatprep.subr.bf16.mxu0 0
    %626 = vmatpush1.bf16.msra.mxu0 0
    %627 = vmatprep.subr.bf16.mxu0 0
    %628 = vmatpush1.bf16.msra.mxu0 0
    %629 = vmatprep.subr.bf16.mxu0 0
    %630 = vmatpush1.bf16.msra.mxu0 0
    %631 = vmatprep.subr.bf16.mxu0 0
    %632 = vmatpush1.bf16.msra.mxu0 0
    %633 = vmatprep.subr.bf16.mxu0 0
    %634 = vmatpush1.bf16.msra.mxu0 0
    %635 = vmatprep.subr.bf16.mxu0 0
    %636 = vmatpush1.bf16.msra.mxu0 0
    %637 = vmatprep.subr.bf16.mxu0 0
    %638 = vmatpush1.bf16.msra.mxu0 0
    %639 = vmatprep.mubr.bf16.mxu0 0
    %640 = vmatmul.mubr.bf16.gmra.mrb[0].mxu0 %v602
    %v641 = vpop.f32.mrb[0].mxu0
    %v642 = vadd.f32 %v112, %v641
    %v643 = vpop.f32.mrb[0].mxu0
    %v644 = vpop.f32.mrb[0].mxu0
    %v645 = vadd.f32 %v112, %v644
    %v646 = vpop.f32.mrb[0].mxu0
    %647 = vmatprep.mubr.bf16.mxu0 0
    %648 = vmatmul.mubr.bf16.gmra.mrb[0].mxu0 %v605
    %v649 = vpop.f32.mrb[0].mxu0
    %v650 = vadd.f32 %v112, %v649
    %v651 = vpop.f32.mrb[0].mxu0
    %v652 = vpop.f32.mrb[0].mxu0
    %v653 = vadd.f32 %v112, %v652
    %v654 = vpop.f32.mrb[0].mxu0
    %655 = vdwg.mxu0
    %v656 = vtanh.pop %v642
    %v657 = vtanh.pop %v645
    %v658 = vtanh.pop %v650
    %v659 = vtanh.pop %v653
    %v660 = vpack.c.bf16 %v657, %v656
    %v661 = vpack.c.bf16 %v659, %v658
    %v663 = vsel %vm125, %v660, 0
    %v666 = vsel %vm125, %v661, 0
    %668 = vmatprep.subr.bf16.mxu0 0
    %669 = vmatpush1.bf16.msra.mxu0 %v214
    %670 = vmatprep.subr.bf16.mxu0 0
    %671 = vmatpush1.bf16.msra.mxu0 %v215
    %672 = vmatprep.subr.bf16.mxu0 0
    %673 = vmatpush1.bf16.msra.mxu0 0
    %674 = vmatprep.subr.bf16.mxu0 0
    %675 = vmatpush1.bf16.msra.mxu0 0
    %676 = vmatprep.subr.bf16.mxu0 0
    %677 = vmatpush1.bf16.msra.mxu0 0
    %678 = vmatprep.subr.bf16.mxu0 0
    %679 = vmatpush1.bf16.msra.mxu0 0
    %680 = vmatprep.subr.bf16.mxu0 0
    %681 = vmatpush1.bf16.msra.mxu0 0
    %682 = vmatprep.subr.bf16.mxu0 0
    %683 = vmatpush1.bf16.msra.mxu0 0
    %684 = vmatprep.subr.bf16.mxu0 0
    %685 = vmatpush1.bf16.msra.mxu0 0
    %686 = vmatprep.subr.bf16.mxu0 0
    %687 = vmatpush1.bf16.msra.mxu0 0
    %688 = vmatprep.subr.bf16.mxu0 0
    %689 = vmatpush1.bf16.msra.mxu0 0
    %690 = vmatprep.subr.bf16.mxu0 0
    %691 = vmatpush1.bf16.msra.mxu0 0
    %692 = vmatprep.subr.bf16.mxu0 0
    %693 = vmatpush1.bf16.msra.mxu0 0
    %694 = vmatprep.subr.bf16.mxu0 0
    %695 = vmatpush1.bf16.msra.mxu0 0
    %696 = vmatprep.subr.bf16.mxu0 0
    %697 = vmatpush1.bf16.msra.mxu0 0
    %698 = vmatprep.subr.bf16.mxu0 0
    %699 = vmatpush1.bf16.msra.mxu0 0
    %700 = vmatprep.mubr.bf16.mxu0 0
    %701 = vmatmul.mubr.bf16.gmra.mrb[0].mxu0 %v663
    %v702 = vpop.f32.mrb[0].mxu0
    %v703 = vadd.f32 %v205, %v702
    %v704 = vpop.f32.mrb[0].mxu0
    %v705 = vpop.f32.mrb[0].mxu0
    %v706 = vadd.f32 %v205, %v705
    %v707 = vpop.f32.mrb[0].mxu0
    %708 = vmatprep.mubr.bf16.mxu0 0
    %709 = vmatmul.mubr.bf16.gmra.mrb[0].mxu0 %v666
    %v710 = vpop.f32.mrb[0].mxu0
    %v711 = vadd.f32 %v205, %v710
    %v712 = vpop.f32.mrb[0].mxu0
    %v713 = vpop.f32.mrb[0].mxu0
    %v714 = vadd.f32 %v205, %v713
    %v715 = vpop.f32.mrb[0].mxu0
    %716 = vdwg.mxu0
    %v717 = vtanh.pop %v703
    %v718 = vtanh.pop %v706
    %v719 = vtanh.pop %v711
    %v720 = vtanh.pop %v714
    %v721 = vpack.c.bf16 %v718, %v717
    %v722 = vpack.c.bf16 %v720, %v719
    %v724 = vsel %vm125, %v721, 0
    %v727 = vsel %vm125, %v722, 0
    %729 = vmatprep.subr.bf16.mxu0 0
    %730 = vmatpush1.bf16.msra.mxu0 %v303
    %731 = vmatprep.subr.bf16.mxu0 0
    %732 = vmatpush1.bf16.msra.mxu0 %v304
    %733 = vmatprep.subr.bf16.mxu0 0
    %734 = vmatpush1.bf16.msra.mxu0 0
    %735 = vmatprep.subr.bf16.mxu0 0
    %736 = vmatpush1.bf16.msra.mxu0 0
    %737 = vmatprep.subr.bf16.mxu0 0
    %738 = vmatpush1.bf16.msra.mxu0 0
    %739 = vmatprep.subr.bf16.mxu0 0
    %740 = vmatpush1.bf16.msra.mxu0 0
    %741 = vmatprep.subr.bf16.mxu0 0
    %742 = vmatpush1.bf16.msra.mxu0 0
    %743 = vmatprep.subr.bf16.mxu0 0
    %744 = vmatpush1.bf16.msra.mxu0 0
    %745 = vmatprep.subr.bf16.mxu0 0
    %746 = vmatpush1.bf16.msra.mxu0 0
    %747 = vmatprep.subr.bf16.mxu0 0
    %748 = vmatpush1.bf16.msra.mxu0 0
    %749 = vmatprep.subr.bf16.mxu0 0
    %750 = vmatpush1.bf16.msra.mxu0 0
    %751 = vmatprep.subr.bf16.mxu0 0
    %752 = vmatpush1.bf16.msra.mxu0 0
    %753 = vmatprep.subr.bf16.mxu0 0
    %754 = vmatpush1.bf16.msra.mxu0 0
    %755 = vmatprep.subr.bf16.mxu0 0
    %756 = vmatpush1.bf16.msra.mxu0 0
    %757 = vmatprep.subr.bf16.mxu0 0
    %758 = vmatpush1.bf16.msra.mxu0 0
    %759 = vmatprep.subr.bf16.mxu0 0
    %760 = vmatpush1.bf16.msra.mxu0 0
    %761 = vmatprep.mubr.bf16.mxu0 0
    %762 = vmatmul.mubr.bf16.gmra.mrb[0].mxu0 %v724
    %v763 = vpop.f32.mrb[0].mxu0
    %v764 = vadd.f32 %v293, %v763
    %v765 = vpop.f32.mrb[0].mxu0
    %v766 = vpop.f32.mrb[0].mxu0
    %v767 = vadd.f32 %v293, %v766
    %v768 = vpop.f32.mrb[0].mxu0
    %769 = vmatprep.mubr.bf16.mxu0 0
    %770 = vmatmul.mubr.bf16.gmra.mrb[0].mxu0 %v727
    %v771 = vpop.f32.mrb[0].mxu0
    %v772 = vadd.f32 %v293, %v771
    %v773 = vpop.f32.mrb[0].mxu0
    %v774 = vpop.f32.mrb[0].mxu0
    %v775 = vadd.f32 %v293, %v774
    %v776 = vpop.f32.mrb[0].mxu0
    %777 = vdwg.mxu0
    %v778 = vsub.f32 %v764, %v89
    %v779 = vsub.f32 %v767, %v90
    %v780 = vsub.f32 %v772, %v91
    %v781 = vsub.f32 %v775, %v92
    %v782 = vmul.f32 %v778, %v778
    %v783 = vmul.f32 %v779, %v779
    %v784 = vmul.f32 %v780, %v780
    %v785 = vmul.f32 %v781, %v781
    %v786 = vlaneseq
    %v787 = vshrl.u32 %v786, 7
    %v788 = vadd.s32 %v787, 8
    %s789 = smul.u32 0, 16
    %v790 = vstv %s789
    %v791 = vadd.s32 %v790, %v787
    %v792 = vadd.s32 %v790, %v788
    %vm793 = vcmp.lt.s32.totalorder %v791, 14
    %vm794 = vcmp.lt.s32.totalorder %v792, 14
    %v795 = vsel %vm793, 1, 0
    %v796 = vsel %vm794, 1, 0
    %v797 = vcvt.s32.f32 %v795
    %v798 = vcvt.s32.f32 %v796
    %v799 = vmul.f32 %v782, %v797
    %v800 = vmul.f32 %v783, %v798
    %v801 = vmul.f32 %v784, %v797
    %v802 = vmul.f32 %v785, %v798
    %v803 = vadd.f32 %v799, %v800
    %v804 = vrot.slane %v803, 4
    %v805 = vadd.f32 %v803, %v804
    %v806 = vrot.slane %v805, 2
    %v807 = vadd.f32 %v805, %v806
    %v808 = vrot.slane %v807, 1
    %v809 = vadd.f32 %v807, %v808
    %v810 = vadd.f32 %v801, %v802
    %v811 = vrot.slane %v810, 4
    %v812 = vadd.f32 %v810, %v811
    %v813 = vrot.slane %v812, 2
    %v814 = vadd.f32 %v812, %v813
    %v815 = vrot.slane %v814, 1
    %v816 = vadd.f32 %v814, %v815
    %vm819 = vcmask 1041409
    %v820 = vsel %vm819, %v816, %v809
    %822 = vst [vmem:[#allocation10] sm:$0x3] %v820
    // Predicated region
    $region46: #{tpu_custom_call.1} parent=1 // pred_check
      _
    $region47: #{tpu_custom_call.1} parent=1 // pred_check_branch
      %824 = sbr.rel (0) target = $region49
    $region48: #{tpu_custom_call.1} parent=1 // pred_region
      %s826 = ssub.s32 32, 32
      %827 = vsyncadd [#allocation4], %s826
      %s829 = sshll.u32 [#allocation10], 4
      %s830 = int_to_ptr.vmem [resolvable:$true] %s829
      %832 = dma.vmem_to_hbm [thread:$0]  %s830, 32, %s7, [#allocation4]
    $region49: #{tpu_custom_call.1} parent=1 // pred_fallthru
      _
    // Predicated region
    $region50: #{tpu_custom_call.1} parent=1 // pred_check
      _
    $region51: #{tpu_custom_call.1} parent=1 // pred_check_branch
      %834 = sbr.rel (0) target = $region53
    $region52: #{tpu_custom_call.1} parent=1 // pred_region
      %835 = dma.done [#allocation4], 32
    $region53: #{tpu_custom_call.1} parent=1 // pred_fallthru
      _
    %836 = vsyncpa [#allocation3], 1
    %837 = vsyncpa [#allocation6], 1
    %838 = vsyncpa [#allocation9], 1
    %839 = vsyncpa [#allocation4], 1

// kernel: tpu_custom_call.1
$region0: #{tpu_custom_call.1}
  #allocation0 [shape = 'u32[]', space=smem, size = 0x4, offset = 0x4, fixed_abs, tag = 'smem constant byte address 0x4 - core index']
  #allocation1 [shape = 'u32[144,128]{1,0:T(1,128)}', space=vmem, size = 0x12000, scoped, tag = 'internal scratch']
  %s0 = inlined_call_operand.hbm [shape: f32[16,32], index: 0, kind: input, shape index: {}]
  %s1 = inlined_call_operand.hbm [shape: f32[2,16,32], index: 1, kind: input, shape index: {}]
  %s2 = inlined_call_operand.hbm [shape: f32[2,16,128], index: 2, kind: input, shape index: {}]
  %s3 = inlined_call_operand.hbm [shape: bf16[2,32,32], index: 3, kind: input, shape index: {}]
  %s4 = inlined_call_operand.vmem [shape: f32[2,32], index: 4, kind: input, shape index: {}]
  %s5 = inlined_call_operand.vmem [shape: bf16[32,128], index: 5, kind: input, shape index: {}]
  %s6 = inlined_call_operand.vmem [shape: f32[1,128], index: 6, kind: input, shape index: {}]
  %s7 = inlined_call_operand.hbm [shape: f32[1,2,128], index: 7, kind: output, shape index: {}]
  %s8 = sld [smem:[#allocation0]]
  $region54: #{tpu_custom_call.1} parent=0
    _
  %s10 = ssub.s32 1, %s8
  %s11 = scalar_select 0, %s10, %s8
  $region1: #{tpu_custom_call.1} parent=0
    #allocation2 [shape = 'u8[8192]{0}', space=vmem, size = 0x2000, scoped, tag = 'input window, operand 0, single buffered']
    #allocation3 [shape = 's32[1]{0}', space=sflag, size = 0x4, scoped, tag = 'scoped memory for tpu_custom_call.1']
    #allocation4 [shape = 's32[1]{0}', space=sflag, size = 0x4, scoped, tag = 'scoped memory for tpu_custom_call.1']
    #allocation5 [shape = 'u8[16384]{0}', space=vmem, size = 0x4000, scoped, tag = 'input window, operand 1, single buffered']
    #allocation6 [shape = 's32[1]{0}', space=sflag, size = 0x4, scoped, tag = 'scoped memory for tpu_custom_call.1']
    #allocation7 [shape = 'u8[16384]{0}', space=vmem, size = 0x4000, scoped, tag = 'input window, operand 2, single buffered']
    #allocation8 [shape = 'u8[16384]{0}', space=vmem, size = 0x4000, scoped, tag = 'input window, operand 3, single buffered']
    #allocation9 [shape = 's32[1]{0}', space=sflag, size = 0x4, scoped, tag = 'scoped memory for tpu_custom_call.1']
    #allocation10 [shape = 'u8[1024]{0}', space=vmem, size = 0x400, scoped, tag = 'output window, operand 0, single buffered']
    %12 = vsyncpa [#allocation3], 0
    %13 = vsyncpa [#allocation6], 0
    %14 = vsyncpa [#allocation9], 0
    %15 = vsyncpa [#allocation4], 0
    // Predicated region
    $region2: #{tpu_custom_call.1} parent=1 // pred_check
      _
    $region3: #{tpu_custom_call.1} parent=1 // pred_check_branch
      %17 = sbr.rel (0) target = $region5
    $region4: #{tpu_custom_call.1} parent=1 // pred_region
      %s19 = ssub.s32 256, 256
      %20 = vsyncadd [#allocation3], %s19
      %s21 = sshll.u32 [#allocation2], 4
      %s22 = int_to_ptr.vmem [resolvable:$true] %s21
      %27 = dma.hbm_to_vmem [thread:$0]  %s0, 256, %s22, [#allocation3], 128, 128, 8
    $region5: #{tpu_custom_call.1} parent=1 // pred_fallthru
      _
    // Predicated region
    $region6: #{tpu_custom_call.1} parent=1 // pred_check
      _
    $region7: #{tpu_custom_call.1} parent=1 // pred_check_branch
      %29 = sbr.rel (0) target = $region9
    $region8: #{tpu_custom_call.1} parent=1 // pred_region
      %s31 = ssub.s32 512, 512
      %32 = vsyncadd [#allocation6], %s31
      %s33 = sshll.u32 [#allocation5], 4
      %s34 = int_to_ptr.vmem [resolvable:$true] %s33
      %39 = dma.hbm_to_vmem [thread:$0]  %s1, 512, %s34, [#allocation6], 128, 128, 8
    $region9: #{tpu_custom_call.1} parent=1 // pred_fallthru
      _
    // Predicated region
    $region10: #{tpu_custom_call.1} parent=1 // pred_check
      _
    $region11: #{tpu_custom_call.1} parent=1 // pred_check_branch
      %41 = sbr.rel (0) target = $region13
    $region12: #{tpu_custom_call.1} parent=1 // pred_region
      %s43 = ssub.s32 512, 512
      %44 = vsyncadd [#allocation6], %s43
      %s45 = sshll.u32 [#allocation7], 4
      %s46 = int_to_ptr.vmem [resolvable:$true] %s45
      %51 = dma.hbm_to_vmem [thread:$0]  %s2, 512, %s46, [#allocation6], 128, 128, 8
    $region13: #{tpu_custom_call.1} parent=1 // pred_fallthru
      _
    // Predicated region
    $region14: #{tpu_custom_call.1} parent=1 // pred_check
      _
    $region15: #{tpu_custom_call.1} parent=1 // pred_check_branch
      %53 = sbr.rel (0) target = $region17
    $region16: #{tpu_custom_call.1} parent=1 // pred_region
      %s55 = ssub.s32 512, 512
      %56 = vsyncadd [#allocation9], %s55
      %s57 = sshll.u32 [#allocation8], 4
      %s58 = int_to_ptr.vmem [resolvable:$true] %s57
      %63 = dma.hbm_to_vmem [thread:$0]  %s3, 512, %s58, [#allocation9], 64, 64, 4
    $region17: #{tpu_custom_call.1} parent=1 // pred_fallthru
      _
    // Predicated region
    $region18: #{tpu_custom_call.1} parent=1 // pred_check
      _
    $region19: #{tpu_custom_call.1} parent=1 // pred_check_branch
      %65 = sbr.rel (0) target = $region21
    $region20: #{tpu_custom_call.1} parent=1 // pred_region
      _
    $region21: #{tpu_custom_call.1} parent=1 // pred_fallthru
      _
    // Predicated region
    $region22: #{tpu_custom_call.1} parent=1 // pred_check
      _
    $region23: #{tpu_custom_call.1} parent=1 // pred_check_branch
      %67 = sbr.rel (0) target = $region25
    $region24: #{tpu_custom_call.1} parent=1 // pred_region
      _
    $region25: #{tpu_custom_call.1} parent=1 // pred_fallthru
      _
    // Predicated region
    $region26: #{tpu_custom_call.1} parent=1 // pred_check
      _
    $region27: #{tpu_custom_call.1} parent=1 // pred_check_branch
      %69 = sbr.rel (0) target = $region29
    $region28: #{tpu_custom_call.1} parent=1 // pred_region
      _
    $region29: #{tpu_custom_call.1} parent=1 // pred_fallthru
      _
    // Predicated region
    $region30: #{tpu_custom_call.1} parent=1 // pred_check
      _
    $region31: #{tpu_custom_call.1} parent=1 // pred_check_branch
      %71 = sbr.rel (0) target = $region33
    $region32: #{tpu_custom_call.1} parent=1 // pred_region
      %72 = dma.done [#allocation3], 256
    $region33: #{tpu_custom_call.1} parent=1 // pred_fallthru
      _
    // Predicated region
    $region34: #{tpu_custom_call.1} parent=1 // pred_check
      _
    $region35: #{tpu_custom_call.1} parent=1 // pred_check_branch
      %74 = sbr.rel (0) target = $region37
    $region36: #{tpu_custom_call.1} parent=1 // pred_region
      %75 = dma.done [#allocation6], 512
    $region37: #{tpu_custom_call.1} parent=1 // pred_fallthru
      _
    // Predicated region
    $region38: #{tpu_custom_call.1} parent=1 // pred_check
      _
    $region39: #{tpu_custom_call.1} parent=1 // pred_check_branch
      %77 = sbr.rel (0) target = $region41
    $region40: #{tpu_custom_call.1} parent=1 // pred_region
      %78 = dma.done [#allocation6], 512
    $region41: #{tpu_custom_call.1} parent=1 // pred_fallthru
      _
    // Predicated region
    $region42: #{tpu_custom_call.1} parent=1 // pred_check
      _
    $region43: #{tpu_custom_call.1} parent=1 // pred_check_branch
      %80 = sbr.rel (0) target = $region45
    $region44: #{tpu_custom_call.1} parent=1 // pred_region
      %81 = dma.done [#allocation9], 512
    $region45: #{tpu_custom_call.1} parent=1 // pred_fallthru
      _
    %v83 = vld [vmem:[#allocation2] sm:$0xff]
    %v84 = vld [vmem:[#allocation2 + $0x8] sm:$0xff]
    %v85 = vld [vmem:[#allocation5] sm:$0xff]
    %v86 = vld [vmem:[#allocation5 + $0x8] sm:$0xff]
    %v87 = vld [vmem:[#allocation5 + $0x10] sm:$0xff]
    %v88 = vld [vmem:[#allocation5 + $0x18] sm:$0xff]
    %v89 = vld [vmem:[#allocation7] sm:$0xff]
    %v90 = vld [vmem:[#allocation7 + $0x8] sm:$0xff]
    %v91 = vld [vmem:[#allocation7 + $0x10] sm:$0xff]
    %v92 = vld [vmem:[#allocation7 + $0x18] sm:$0xff]
    %v93 = vld [vmem:[%s4] sm:$0x3]
    %v94 = vld [vmem:[%s6] sm:$0x1]
    %v95 = vld [vmem:[%s5] sm:$0xf]
    %v96 = vld [vmem:[%s5 + $0x4] sm:$0xf]
    %v97 = vld [vmem:[%s5 + $0x8] sm:$0xf]
    %v98 = vld [vmem:[%s5 + $0xc] sm:$0xf]
    %v99 = vadd.f32 %v83, %v85
    %v100 = vadd.f32 %v84, %v86
    %v101 = vadd.f32 %v83, %v87
    %v102 = vadd.f32 %v84, %v88
    %v103 = vpack.c.bf16 %v100, %v99
    %v104 = vpack.c.bf16 %v102, %v101
    %v105 = vld [vmem:[#allocation8] sm:$0xf]
    %v106 = vld [vmem:[#allocation8 + $0x4] sm:$0xf]
    %v107 = vld [vmem:[#allocation8 + $0x8] sm:$0xf]
    %v108 = vld [vmem:[#allocation8 + $0xc] sm:$0xf]
    %v109 = vlaneseq
    %v110 = vshrl.u32 %v109, 7
    %v111 = vsub.s32 0, %v110
    %v112 = vrot.slane %v93, %v111
    %v117 = vunpack.c.l.b16 %v105
    %v118 = vunpack.c.l.b16 %v106
    %v119 = vunpack.c.l.b16 %v107
    %v120 = vunpack.c.l.b16 %v108
    %v121 = vpack.c.b16 %v118, %v117
    %v122 = vpack.c.b16 %v120, %v119
    %vm125 = vcmask 261120
    %v127 = vsel %vm125, %v103, 0
    %v130 = vsel %vm125, %v104, 0
    %132 = vmatprep.subr.bf16.mxu0 0
    %133 = vmatpush1.bf16.msra.mxu0 %v121
    %134 = vmatprep.subr.bf16.mxu0 0
    %135 = vmatpush1.bf16.msra.mxu0 %v122
    %136 = vmatprep.subr.bf16.mxu0 0
    %137 = vmatpush1.bf16.msra.mxu0 0
    %138 = vmatprep.subr.bf16.mxu0 0
    %139 = vmatpush1.bf16.msra.mxu0 0
    %140 = vmatprep.subr.bf16.mxu0 0
    %141 = vmatpush1.bf16.msra.mxu0 0
    %142 = vmatprep.subr.bf16.mxu0 0
    %143 = vmatpush1.bf16.msra.mxu0 0
    %144 = vmatprep.subr.bf16.mxu0 0
    %145 = vmatpush1.bf16.msra.mxu0 0
    %146 = vmatprep.subr.bf16.mxu0 0
    %147 = vmatpush1.bf16.msra.mxu0 0
    %148 = vmatprep.subr.bf16.mxu0 0
    %149 = vmatpush1.bf16.msra.mxu0 0
    %150 = vmatprep.subr.bf16.mxu0 0
    %151 = vmatpush1.bf16.msra.mxu0 0
    %152 = vmatprep.subr.bf16.mxu0 0
    %153 = vmatpush1.bf16.msra.mxu0 0
    %154 = vmatprep.subr.bf16.mxu0 0
    %155 = vmatpush1.bf16.msra.mxu0 0
    %156 = vmatprep.subr.bf16.mxu0 0
    %157 = vmatpush1.bf16.msra.mxu0 0
    %158 = vmatprep.subr.bf16.mxu0 0
    %159 = vmatpush1.bf16.msra.mxu0 0
    %160 = vmatprep.subr.bf16.mxu0 0
    %161 = vmatpush1.bf16.msra.mxu0 0
    %162 = vmatprep.subr.bf16.mxu0 0
    %163 = vmatpush1.bf16.msra.mxu0 0
    %164 = vmatprep.mubr.bf16.mxu0 0
    %165 = vmatmul.mubr.bf16.gmra.mrb[0].mxu0 %v127
    %v166 = vpop.f32.mrb[0].mxu0
    %v167 = vadd.f32 %v112, %v166
    %v168 = vpop.f32.mrb[0].mxu0
    %v169 = vpop.f32.mrb[0].mxu0
    %v170 = vadd.f32 %v112, %v169
    %v171 = vpop.f32.mrb[0].mxu0
    %172 = vmatprep.mubr.bf16.mxu0 0
    %173 = vmatmul.mubr.bf16.gmra.mrb[0].mxu0 %v130
    %v174 = vpop.f32.mrb[0].mxu0
    %v175 = vadd.f32 %v112, %v174
    %v176 = vpop.f32.mrb[0].mxu0
    %v177 = vpop.f32.mrb[0].mxu0
    %v178 = vadd.f32 %v112, %v177
    %v179 = vpop.f32.mrb[0].mxu0
    %180 = vdwg.mxu0
    %v181 = vtanh.pop %v167
    %v182 = vtanh.pop %v170
    %v183 = vtanh.pop %v175
    %v184 = vtanh.pop %v178
    %v185 = vmul.f32 %v181, %v181
    %v186 = vmul.f32 %v182, %v182
    %v187 = vmul.f32 %v183, %v183
    %v188 = vmul.f32 %v184, %v184
    %v189 = vsub.f32 1.0, %v185
    %v190 = vsub.f32 1.0, %v186
    %v191 = vsub.f32 1.0, %v187
    %v192 = vsub.f32 1.0, %v188
    %v193 = vpack.c.bf16 %v190, %v189
    %v194 = vpack.c.bf16 %v192, %v191
    %v195 = vpack.c.bf16 %v182, %v181
    %v196 = vpack.c.bf16 %v184, %v183
    %s197 = scalar_lea.vmem [#allocation8], 16
    %v198 = vld [vmem:[%s197] sm:$0xf]
    %v199 = vld [vmem:[%s197 + $0x4] sm:$0xf]
    %v200 = vld [vmem:[%s197 + $0x8] sm:$0xf]
    %v201 = vld [vmem:[%s197 + $0xc] sm:$0xf]
    %v202 = vlaneseq
    %v203 = vshrl.u32 %v202, 7
    %v204 = vsub.s32 1, %v203
    %v205 = vrot.slane %v93, %v204
    %v210 = vunpack.c.l.b16 %v198
    %v211 = vunpack.c.l.b16 %v199
    %v212 = vunpack.c.l.b16 %v200
    %v213 = vunpack.c.l.b16 %v201
    %v214 = vpack.c.b16 %v211, %v210
    %v215 = vpack.c.b16 %v213, %v212
    %v219 = vsel %vm125, %v195, 0
    %v222 = vsel %vm125, %v196, 0
    %224 = vmatprep.subr.bf16.mxu0 0
    %225 = vmatpush1.bf16.msra.mxu0 %v214
    %226 = vmatprep.subr.bf16.mxu0 0
    %227 = vmatpush1.bf16.msra.mxu0 %v215
    %228 = vmatprep.subr.bf16.mxu0 0
    %229 = vmatpush1.bf16.msra.mxu0 0
    %230 = vmatprep.subr.bf16.mxu0 0
    %231 = vmatpush1.bf16.msra.mxu0 0
    %232 = vmatprep.subr.bf16.mxu0 0
    %233 = vmatpush1.bf16.msra.mxu0 0
    %234 = vmatprep.subr.bf16.mxu0 0
    %235 = vmatpush1.bf16.msra.mxu0 0
    %236 = vmatprep.subr.bf16.mxu0 0
    %237 = vmatpush1.bf16.msra.mxu0 0
    %238 = vmatprep.subr.bf16.mxu0 0
    %239 = vmatpush1.bf16.msra.mxu0 0
    %240 = vmatprep.subr.bf16.mxu0 0
    %241 = vmatpush1.bf16.msra.mxu0 0
    %242 = vmatprep.subr.bf16.mxu0 0
    %243 = vmatpush1.bf16.msra.mxu0 0
    %244 = vmatprep.subr.bf16.mxu0 0
    %245 = vmatpush1.bf16.msra.mxu0 0
    %246 = vmatprep.subr.bf16.mxu0 0
    %247 = vmatpush1.bf16.msra.mxu0 0
    %248 = vmatprep.subr.bf16.mxu0 0
    %249 = vmatpush1.bf16.msra.mxu0 0
    %250 = vmatprep.subr.bf16.mxu0 0
    %251 = vmatpush1.bf16.msra.mxu0 0
    %252 = vmatprep.subr.bf16.mxu0 0
    %253 = vmatpush1.bf16.msra.mxu0 0
    %254 = vmatprep.subr.bf16.mxu0 0
    %255 = vmatpush1.bf16.msra.mxu0 0
    %256 = vmatprep.mubr.bf16.mxu0 0
    %257 = vmatmul.mubr.bf16.gmra.mrb[0].mxu0 %v219
    %v258 = vpop.f32.mrb[0].mxu0
    %v259 = vadd.f32 %v205, %v258
    %v260 = vpop.f32.mrb[0].mxu0
    %v261 = vpop.f32.mrb[0].mxu0
    %v262 = vadd.f32 %v205, %v261
    %v263 = vpop.f32.mrb[0].mxu0
    %264 = vmatprep.mubr.bf16.mxu0 0
    %265 = vmatmul.mubr.bf16.gmra.mrb[0].mxu0 %v222
    %v266 = vpop.f32.mrb[0].mxu0
    %v267 = vadd.f32 %v205, %v266
    %v268 = vpop.f32.mrb[0].mxu0
    %v269 = vpop.f32.mrb[0].mxu0
    %v270 = vadd.f32 %v205, %v269
    %v271 = vpop.f32.mrb[0].mxu0
    %272 = vdwg.mxu0
    %v273 = vtanh.pop %v259
    %v274 = vtanh.pop %v262
    %v275 = vtanh.pop %v267
    %v276 = vtanh.pop %v270
    %v277 = vmul.f32 %v273, %v273
    %v278 = vmul.f32 %v274, %v274
    %v279 = vmul.f32 %v275, %v275
    %v280 = vmul.f32 %v276, %v276
    %v281 = vsub.f32 1.0, %v277
    %v282 = vsub.f32 1.0, %v278
    %v283 = vsub.f32 1.0, %v279
    %v284 = vsub.f32 1.0, %v280
    %v285 = vpack.c.bf16 %v282, %v281
    %v286 = vpack.c.bf16 %v284, %v283
    %v287 = vpack.c.bf16 %v274, %v273
    %v288 = vpack.c.bf16 %v276, %v275
    %v290 = vlaneseq
    %v291 = vshrl.u32 %v290, 7
    %v292 = vsub.s32 0, %v291
    %v293 = vrot.slane %v94, %v292
    %v299 = vunpack.c.l.b16 %v95
    %v300 = vunpack.c.l.b16 %v96
    %v301 = vunpack.c.l.b16 %v97
    %v302 = vunpack.c.l.b16 %v98
    %v303 = vpack.c.b16 %v300, %v299
    %v304 = vpack.c.b16 %v302, %v301
    %v308 = vsel %vm125, %v287, 0
    %v311 = vsel %vm125, %v288, 0
    %313 = vmatprep.subr.bf16.mxu0 0
    %314 = vmatpush1.bf16.msra.mxu0 %v303
    %315 = vmatprep.subr.bf16.mxu0 0
    %316 = vmatpush1.bf16.msra.mxu0 %v304
    %317 = vmatprep.subr.bf16.mxu0 0
    %318 = vmatpush1.bf16.msra.mxu0 0
    %319 = vmatprep.subr.bf16.mxu0 0
    %320 = vmatpush1.bf16.msra.mxu0 0
    %321 = vmatprep.subr.bf16.mxu0 0
    %322 = vmatpush1.bf16.msra.mxu0 0
    %323 = vmatprep.subr.bf16.mxu0 0
    %324 = vmatpush1.bf16.msra.mxu0 0
    %325 = vmatprep.subr.bf16.mxu0 0
    %326 = vmatpush1.bf16.msra.mxu0 0
    %327 = vmatprep.subr.bf16.mxu0 0
    %328 = vmatpush1.bf16.msra.mxu0 0
    %329 = vmatprep.subr.bf16.mxu0 0
    %330 = vmatpush1.bf16.msra.mxu0 0
    %331 = vmatprep.subr.bf16.mxu0 0
    %332 = vmatpush1.bf16.msra.mxu0 0
    %333 = vmatprep.subr.bf16.mxu0 0
    %334 = vmatpush1.bf16.msra.mxu0 0
    %335 = vmatprep.subr.bf16.mxu0 0
    %336 = vmatpush1.bf16.msra.mxu0 0
    %337 = vmatprep.subr.bf16.mxu0 0
    %338 = vmatpush1.bf16.msra.mxu0 0
    %339 = vmatprep.subr.bf16.mxu0 0
    %340 = vmatpush1.bf16.msra.mxu0 0
    %341 = vmatprep.subr.bf16.mxu0 0
    %342 = vmatpush1.bf16.msra.mxu0 0
    %343 = vmatprep.subr.bf16.mxu0 0
    %344 = vmatpush1.bf16.msra.mxu0 0
    %345 = vmatprep.mubr.bf16.mxu0 0
    %346 = vmatmul.mubr.bf16.gmra.mrb[0].mxu0 %v308
    %v347 = vpop.f32.mrb[0].mxu0
    %v348 = vadd.f32 %v293, %v347
    %v349 = vpop.f32.mrb[0].mxu0
    %v350 = vpop.f32.mrb[0].mxu0
    %v351 = vadd.f32 %v293, %v350
    %v352 = vpop.f32.mrb[0].mxu0
    %353 = vmatprep.mubr.bf16.mxu0 0
    %354 = vmatmul.mubr.bf16.gmra.mrb[0].mxu0 %v311
    %v355 = vpop.f32.mrb[0].mxu0
    %v356 = vadd.f32 %v293, %v355
    %v357 = vpop.f32.mrb[0].mxu0
    %v358 = vpop.f32.mrb[0].mxu0
    %v359 = vadd.f32 %v293, %v358
    %v360 = vpop.f32.mrb[0].mxu0
    %361 = vdwg.mxu0
    %v362 = vsub.f32 %v348, %v89
    %v363 = vsub.f32 %v351, %v90
    %v364 = vsub.f32 %v356, %v91
    %v365 = vsub.f32 %v359, %v92
    %v366 = vpack.c.bf16 %v363, %v362
    %v367 = vpack.c.bf16 %v365, %v364
    %368 = vmatprep.subr.bf16.mxu0 0
    %369 = vmatpush1.bf16.xpose.msra.mxu0 %v303
    %370 = vmatprep.subr.bf16.mxu0 0
    %371 = vmatpush1.bf16.xpose.msra.mxu0 %v304
    %372 = vmatprep.subr.bf16.mxu0 0
    %373 = vmatpush1.bf16.xpose.msra.mxu0 0
    %374 = vmatprep.subr.bf16.mxu0 0
    %375 = vmatpush1.bf16.xpose.msra.mxu0 0
    %376 = vmatprep.subr.bf16.mxu0 0
    %377 = vmatpush1.bf16.xpose.msra.mxu0 0
    %378 = vmatprep.subr.bf16.mxu0 0
    %379 = vmatpush1.bf16.xpose.msra.mxu0 0
    %380 = vmatprep.subr.bf16.mxu0 0
    %381 = vmatpush1.bf16.xpose.msra.mxu0 0
    %382 = vmatprep.subr.bf16.mxu0 0
    %383 = vmatpush1.bf16.xpose.msra.mxu0 0
    %384 = vmatprep.subr.bf16.mxu0 0
    %385 = vmatpush1.bf16.xpose.msra.mxu0 0
    %386 = vmatprep.subr.bf16.mxu0 0
    %387 = vmatpush1.bf16.xpose.msra.mxu0 0
    %388 = vmatprep.subr.bf16.mxu0 0
    %389 = vmatpush1.bf16.xpose.msra.mxu0 0
    %390 = vmatprep.subr.bf16.mxu0 0
    %391 = vmatpush1.bf16.xpose.msra.mxu0 0
    %392 = vmatprep.subr.bf16.mxu0 0
    %393 = vmatpush1.bf16.xpose.msra.mxu0 0
    %394 = vmatprep.subr.bf16.mxu0 0
    %395 = vmatpush1.bf16.xpose.msra.mxu0 0
    %396 = vmatprep.subr.bf16.mxu0 0
    %397 = vmatpush1.bf16.xpose.msra.mxu0 0
    %398 = vmatprep.subr.bf16.mxu0 0
    %399 = vmatpush1.bf16.xpose.msra.mxu0 0
    %400 = vmatprep.mubr.bf16.mxu0 0
    %401 = vmatmul.mubr.bf16.gmra.mrb[0].mxu0 %v366
    %v402 = vpop.f32.mrb[0].mxu0
    %v403 = vadd.f32 0.0, %v402
    %v404 = vpop.f32.mrb[0].mxu0
    %v405 = vpop.f32.mrb[0].mxu0
    %v406 = vadd.f32 0.0, %v405
    %v407 = vpop.f32.mrb[0].mxu0
    %408 = vmatprep.mubr.bf16.mxu0 0
    %409 = vmatmul.mubr.bf16.gmra.mrb[0].mxu0 %v367
    %v410 = vpop.f32.mrb[0].mxu0
    %v411 = vadd.f32 0.0, %v410
    %v412 = vpop.f32.mrb[0].mxu0
    %v413 = vpop.f32.mrb[0].mxu0
    %v414 = vadd.f32 0.0, %v413
    %v415 = vpop.f32.mrb[0].mxu0
    %416 = vdwg.mxu0
    %v417 = vunpack.c.l.bf16 %v285
    %v418 = vunpack.c.h.bf16 %v285
    %v419 = vunpack.c.l.bf16 %v286
    %v420 = vunpack.c.h.bf16 %v286
    %v421 = vmul.f32 %v403, %v417
    %v422 = vmul.f32 %v406, %v418
    %v423 = vmul.f32 %v411, %v419
    %v424 = vmul.f32 %v414, %v420
    %v425 = vpack.c.bf16 %v422, %v421
    %v426 = vpack.c.bf16 %v424, %v423
    %v428 = vsel %vm125, %v425, 0
    %v431 = vsel %vm125, %v426, 0
    %v434 = vsel %vm125, %v214, 0
    %v437 = vsel %vm125, %v215, 0
    %439 = vmatprep.subr.bf16.mxu0 0
    %440 = vmatpush1.bf16.xpose.msra.mxu0 %v434
    %441 = vmatprep.subr.bf16.mxu0 0
    %442 = vmatpush1.bf16.xpose.msra.mxu0 %v437
    %443 = vmatprep.subr.bf16.mxu0 0
    %444 = vmatpush1.bf16.xpose.msra.mxu0 0
    %445 = vmatprep.subr.bf16.mxu0 0
    %446 = vmatpush1.bf16.xpose.msra.mxu0 0
    %447 = vmatprep.subr.bf16.mxu0 0
    %448 = vmatpush1.bf16.xpose.msra.mxu0 0
    %449 = vmatprep.subr.bf16.mxu0 0
    %450 = vmatpush1.bf16.xpose.msra.mxu0 0
    %451 = vmatprep.subr.bf16.mxu0 0
    %452 = vmatpush1.bf16.xpose.msra.mxu0 0
    %453 = vmatprep.subr.bf16.mxu0 0
    %454 = vmatpush1.bf16.xpose.msra.mxu0 0
    %455 = vmatprep.subr.bf16.mxu0 0
    %456 = vmatpush1.bf16.xpose.msra.mxu0 0
    %457 = vmatprep.subr.bf16.mxu0 0
    %458 = vmatpush1.bf16.xpose.msra.mxu0 0
    %459 = vmatprep.subr.bf16.mxu0 0
    %460 = vmatpush1.bf16.xpose.msra.mxu0 0
    %461 = vmatprep.subr.bf16.mxu0 0
    %462 = vmatpush1.bf16.xpose.msra.mxu0 0
    %463 = vmatprep.subr.bf16.mxu0 0
    %464 = vmatpush1.bf16.xpose.msra.mxu0 0
    %465 = vmatprep.subr.bf16.mxu0 0
    %466 = vmatpush1.bf16.xpose.msra.mxu0 0
    %467 = vmatprep.subr.bf16.mxu0 0
    %468 = vmatpush1.bf16.xpose.msra.mxu0 0
    %469 = vmatprep.subr.bf16.mxu0 0
    %470 = vmatpush1.bf16.xpose.msra.mxu0 0
    %471 = vmatprep.mubr.bf16.mxu0 0
    %472 = vmatmul.mubr.bf16.gmra.mrb[0].mxu0 %v428
    %v473 = vpop.f32.mrb[0].mxu0
    %v474 = vadd.f32 0.0, %v473
    %v475 = vpop.f32.mrb[0].mxu0
    %v476 = vpop.f32.mrb[0].mxu0
    %v477 = vadd.f32 0.0, %v476
    %v478 = vpop.f32.mrb[0].mxu0
    %479 = vmatprep.mubr.bf16.mxu0 0
    %480 = vmatmul.mubr.bf16.gmra.mrb[0].mxu0 %v431
    %v481 = vpop.f32.mrb[0].mxu0
    %v482 = vadd.f32 0.0, %v481
    %v483 = vpop.f32.mrb[0].mxu0
    %v484 = vpop.f32.mrb[0].mxu0
    %v485 = vadd.f32 0.0, %v484
    %v486 = vpop.f32.mrb[0].mxu0
    %487 = vdwg.mxu0
    %v488 = vunpack.c.l.bf16 %v193
    %v489 = vunpack.c.h.bf16 %v193
    %v490 = vunpack.c.l.bf16 %v194
    %v491 = vunpack.c.h.bf16 %v194
    %v492 = vmul.f32 %v474, %v488
    %v493 = vmul.f32 %v477, %v489
    %v494 = vmul.f32 %v482, %v490
    %v495 = vmul.f32 %v485, %v491
    %v496 = vpack.c.bf16 %v493, %v492
    %v497 = vpack.c.bf16 %v495, %v494
    %v499 = vsel %vm125, %v496, 0
    %v502 = vsel %vm125, %v497, 0
    %v505 = vsel %vm125, %v121, 0
    %v508 = vsel %vm125, %v122, 0
    %510 = vmatprep.subr.bf16.mxu0 0
    %511 = vmatpush1.bf16.xpose.msra.mxu0 %v505
    %512 = vmatprep.subr.bf16.mxu0 0
    %513 = vmatpush1.bf16.xpose.msra.mxu0 %v508
    %514 = vmatprep.subr.bf16.mxu0 0
    %515 = vmatpush1.bf16.xpose.msra.mxu0 0
    %516 = vmatprep.subr.bf16.mxu0 0
    %517 = vmatpush1.bf16.xpose.msra.mxu0 0
    %518 = vmatprep.subr.bf16.mxu0 0
    %519 = vmatpush1.bf16.xpose.msra.mxu0 0
    %520 = vmatprep.subr.bf16.mxu0 0
    %521 = vmatpush1.bf16.xpose.msra.mxu0 0
    %522 = vmatprep.subr.bf16.mxu0 0
    %523 = vmatpush1.bf16.xpose.msra.mxu0 0
    %524 = vmatprep.subr.bf16.mxu0 0
    %525 = vmatpush1.bf16.xpose.msra.mxu0 0
    %526 = vmatprep.subr.bf16.mxu0 0
    %527 = vmatpush1.bf16.xpose.msra.mxu0 0
    %528 = vmatprep.subr.bf16.mxu0 0
    %529 = vmatpush1.bf16.xpose.msra.mxu0 0
    %530 = vmatprep.subr.bf16.mxu0 0
    %531 = vmatpush1.bf16.xpose.msra.mxu0 0
    %532 = vmatprep.subr.bf16.mxu0 0
    %533 = vmatpush1.bf16.xpose.msra.mxu0 0
    %534 = vmatprep.subr.bf16.mxu0 0
    %535 = vmatpush1.bf16.xpose.msra.mxu0 0
    %536 = vmatprep.subr.bf16.mxu0 0
    %537 = vmatpush1.bf16.xpose.msra.mxu0 0
    %538 = vmatprep.subr.bf16.mxu0 0
    %539 = vmatpush1.bf16.xpose.msra.mxu0 0
    %540 = vmatprep.subr.bf16.mxu0 0
    %541 = vmatpush1.bf16.xpose.msra.mxu0 0
    %542 = vmatprep.mubr.bf16.mxu0 0
    %543 = vmatmul.mubr.bf16.gmra.mrb[0].mxu0 %v499
    %v544 = vpop.f32.mrb[0].mxu0
    %v545 = vadd.f32 0.0, %v544
    %v546 = vpop.f32.mrb[0].mxu0
    %v547 = vpop.f32.mrb[0].mxu0
    %v548 = vadd.f32 0.0, %v547
    %v549 = vpop.f32.mrb[0].mxu0
    %550 = vmatprep.mubr.bf16.mxu0 0
    %551 = vmatmul.mubr.bf16.gmra.mrb[0].mxu0 %v502
    %v552 = vpop.f32.mrb[0].mxu0
    %v553 = vadd.f32 0.0, %v552
    %v554 = vpop.f32.mrb[0].mxu0
    %v555 = vpop.f32.mrb[0].mxu0
    %v556 = vadd.f32 0.0, %v555
    %v557 = vpop.f32.mrb[0].mxu0
    %558 = vdwg.mxu0
    %v559 = vmul.f32 %v545, 1.7857143e-05
    %v560 = vmul.f32 %v548, 1.7857143e-05
    %v561 = vmul.f32 %v553, 1.7857143e-05
    %v562 = vmul.f32 %v556, 1.7857143e-05
    %v563 = vadd.f32 %v85, %v559
    %v564 = vadd.f32 %v86, %v560
    %v565 = vadd.f32 %v87, %v561
    %v566 = vadd.f32 %v88, %v562
    %v567 = vand.u32 2147483647, %v563
    %v568 = vand.u32 2147483647, %v564
    %v569 = vand.u32 2147483647, %v565
    %v570 = vand.u32 2147483647, %v566
    %v571 = vsel %vm125, %v567, -inf
    %572 = vmax.xlane.f32.xlu0 %v571
    %v573 = vpop.xlane.xlu0 %572
    %v574 = vsel %vm125, %v568, -inf
    %575 = vmax.xlane.f32.xlu0 %v574
    %v576 = vpop.xlane.xlu0 %575
    %v577 = vsel %vm125, %v569, -inf
    %578 = vmax.xlane.f32.xlu0 %v577
    %v579 = vpop.xlane.xlu0 %578
    %v580 = vsel %vm125, %v570, -inf
    %581 = vmax.xlane.f32.xlu0 %v580
    %v582 = vpop.xlane.xlu0 %581
    %v583 = vadd.f32 %v573, 1e-06
    %v584 = vadd.f32 %v576, 1e-06
    %v585 = vadd.f32 %v579, 1e-06
    %v586 = vadd.f32 %v582, 1e-06
    %v587 = vrcp.pop %v583
    %v588 = vrcp.pop %v584
    %v589 = vrcp.pop %v585
    %v590 = vrcp.pop %v586
    %v591 = vmul.f32 %v563, %v587
    %v592 = vmul.f32 %v564, %v588
    %v593 = vmul.f32 %v565, %v589
    %v594 = vmul.f32 %v566, %v590
    %v595 = vadd.f32 %v83, %v591
    %v596 = vadd.f32 %v84, %v592
    %v597 = vadd.f32 %v83, %v593
    %v598 = vadd.f32 %v84, %v594
    %v599 = vpack.c.bf16 %v596, %v595
    %v600 = vpack.c.bf16 %v598, %v597
    %v602 = vsel %vm125, %v599, 0
    %v605 = vsel %vm125, %v600, 0
    %607 = vmatprep.subr.bf16.mxu0 0
    %608 = vmatpush1.bf16.msra.mxu0 %v121
    %609 = vmatprep.subr.bf16.mxu0 0
    %610 = vmatpush1.bf16.msra.mxu0 %v122
    %611 = vmatprep.subr.bf16.mxu0 0
    %612 = vmatpush1.bf16.msra.mxu0 0
    %613 = vmatprep.subr.bf16.mxu0 0
    %614 = vmatpush1.bf16.msra.mxu0 0
    %615 = vmatprep.subr.bf16.mxu0 0
    %616 = vmatpush1.bf16.msra.mxu0 0
    %617 = vmatprep.subr.bf16.mxu0 0
    %618 = vmatpush1.bf16.msra.mxu0 0
    %619 = vmatprep.subr.bf16.mxu0 0
    %620 = vmatpush1.bf16.msra.mxu0 0
    %621 = vmatprep.subr.bf16.mxu0 0
    %622 = vmatpush1.bf16.msra.mxu0 0
    %623 = vmatprep.subr.bf16.mxu0 0
    %624 = vmatpush1.bf16.msra.mxu0 0
    %625 = vmatprep.subr.bf16.mxu0 0
    %626 = vmatpush1.bf16.msra.mxu0 0
    %627 = vmatprep.subr.bf16.mxu0 0
    %628 = vmatpush1.bf16.msra.mxu0 0
    %629 = vmatprep.subr.bf16.mxu0 0
    %630 = vmatpush1.bf16.msra.mxu0 0
    %631 = vmatprep.subr.bf16.mxu0 0
    %632 = vmatpush1.bf16.msra.mxu0 0
    %633 = vmatprep.subr.bf16.mxu0 0
    %634 = vmatpush1.bf16.msra.mxu0 0
    %635 = vmatprep.subr.bf16.mxu0 0
    %636 = vmatpush1.bf16.msra.mxu0 0
    %637 = vmatprep.subr.bf16.mxu0 0
    %638 = vmatpush1.bf16.msra.mxu0 0
    %639 = vmatprep.mubr.bf16.mxu0 0
    %640 = vmatmul.mubr.bf16.gmra.mrb[0].mxu0 %v602
    %v641 = vpop.f32.mrb[0].mxu0
    %v642 = vadd.f32 %v112, %v641
    %v643 = vpop.f32.mrb[0].mxu0
    %v644 = vpop.f32.mrb[0].mxu0
    %v645 = vadd.f32 %v112, %v644
    %v646 = vpop.f32.mrb[0].mxu0
    %647 = vmatprep.mubr.bf16.mxu0 0
    %648 = vmatmul.mubr.bf16.gmra.mrb[0].mxu0 %v605
    %v649 = vpop.f32.mrb[0].mxu0
    %v650 = vadd.f32 %v112, %v649
    %v651 = vpop.f32.mrb[0].mxu0
    %v652 = vpop.f32.mrb[0].mxu0
    %v653 = vadd.f32 %v112, %v652
    %v654 = vpop.f32.mrb[0].mxu0
    %655 = vdwg.mxu0
    %v656 = vtanh.pop %v642
    %v657 = vtanh.pop %v645
    %v658 = vtanh.pop %v650
    %v659 = vtanh.pop %v653
    %v660 = vpack.c.bf16 %v657, %v656
    %v661 = vpack.c.bf16 %v659, %v658
    %v663 = vsel %vm125, %v660, 0
    %v666 = vsel %vm125, %v661, 0
    %668 = vmatprep.subr.bf16.mxu0 0
    %669 = vmatpush1.bf16.msra.mxu0 %v214
    %670 = vmatprep.subr.bf16.mxu0 0
    %671 = vmatpush1.bf16.msra.mxu0 %v215
    %672 = vmatprep.subr.bf16.mxu0 0
    %673 = vmatpush1.bf16.msra.mxu0 0
    %674 = vmatprep.subr.bf16.mxu0 0
    %675 = vmatpush1.bf16.msra.mxu0 0
    %676 = vmatprep.subr.bf16.mxu0 0
    %677 = vmatpush1.bf16.msra.mxu0 0
    %678 = vmatprep.subr.bf16.mxu0 0
    %679 = vmatpush1.bf16.msra.mxu0 0
    %680 = vmatprep.subr.bf16.mxu0 0
    %681 = vmatpush1.bf16.msra.mxu0 0
    %682 = vmatprep.subr.bf16.mxu0 0
    %683 = vmatpush1.bf16.msra.mxu0 0
    %684 = vmatprep.subr.bf16.mxu0 0
    %685 = vmatpush1.bf16.msra.mxu0 0
    %686 = vmatprep.subr.bf16.mxu0 0
    %687 = vmatpush1.bf16.msra.mxu0 0
    %688 = vmatprep.subr.bf16.mxu0 0
    %689 = vmatpush1.bf16.msra.mxu0 0
    %690 = vmatprep.subr.bf16.mxu0 0
    %691 = vmatpush1.bf16.msra.mxu0 0
    %692 = vmatprep.subr.bf16.mxu0 0
    %693 = vmatpush1.bf16.msra.mxu0 0
    %694 = vmatprep.subr.bf16.mxu0 0
    %695 = vmatpush1.bf16.msra.mxu0 0
    %696 = vmatprep.subr.bf16.mxu0 0
    %697 = vmatpush1.bf16.msra.mxu0 0
    %698 = vmatprep.subr.bf16.mxu0 0
    %699 = vmatpush1.bf16.msra.mxu0 0
    %700 = vmatprep.mubr.bf16.mxu0 0
    %701 = vmatmul.mubr.bf16.gmra.mrb[0].mxu0 %v663
    %v702 = vpop.f32.mrb[0].mxu0
    %v703 = vadd.f32 %v205, %v702
    %v704 = vpop.f32.mrb[0].mxu0
    %v705 = vpop.f32.mrb[0].mxu0
    %v706 = vadd.f32 %v205, %v705
    %v707 = vpop.f32.mrb[0].mxu0
    %708 = vmatprep.mubr.bf16.mxu0 0
    %709 = vmatmul.mubr.bf16.gmra.mrb[0].mxu0 %v666
    %v710 = vpop.f32.mrb[0].mxu0
    %v711 = vadd.f32 %v205, %v710
    %v712 = vpop.f32.mrb[0].mxu0
    %v713 = vpop.f32.mrb[0].mxu0
    %v714 = vadd.f32 %v205, %v713
    %v715 = vpop.f32.mrb[0].mxu0
    %716 = vdwg.mxu0
    %v717 = vtanh.pop %v703
    %v718 = vtanh.pop %v706
    %v719 = vtanh.pop %v711
    %v720 = vtanh.pop %v714
    %v721 = vpack.c.bf16 %v718, %v717
    %v722 = vpack.c.bf16 %v720, %v719
    %v724 = vsel %vm125, %v721, 0
    %v727 = vsel %vm125, %v722, 0
    %729 = vmatprep.subr.bf16.mxu0 0
    %730 = vmatpush1.bf16.msra.mxu0 %v303
    %731 = vmatprep.subr.bf16.mxu0 0
    %732 = vmatpush1.bf16.msra.mxu0 %v304
    %733 = vmatprep.subr.bf16.mxu0 0
    %734 = vmatpush1.bf16.msra.mxu0 0
    %735 = vmatprep.subr.bf16.mxu0 0
    %736 = vmatpush1.bf16.msra.mxu0 0
    %737 = vmatprep.subr.bf16.mxu0 0
    %738 = vmatpush1.bf16.msra.mxu0 0
    %739 = vmatprep.subr.bf16.mxu0 0
    %740 = vmatpush1.bf16.msra.mxu0 0
    %741 = vmatprep.subr.bf16.mxu0 0
    %742 = vmatpush1.bf16.msra.mxu0 0
    %743 = vmatprep.subr.bf16.mxu0 0
    %744 = vmatpush1.bf16.msra.mxu0 0
    %745 = vmatprep.subr.bf16.mxu0 0
    %746 = vmatpush1.bf16.msra.mxu0 0
    %747 = vmatprep.subr.bf16.mxu0 0
    %748 = vmatpush1.bf16.msra.mxu0 0
    %749 = vmatprep.subr.bf16.mxu0 0
    %750 = vmatpush1.bf16.msra.mxu0 0
    %751 = vmatprep.subr.bf16.mxu0 0
    %752 = vmatpush1.bf16.msra.mxu0 0
    %753 = vmatprep.subr.bf16.mxu0 0
    %754 = vmatpush1.bf16.msra.mxu0 0
    %755 = vmatprep.subr.bf16.mxu0 0
    %756 = vmatpush1.bf16.msra.mxu0 0
    %757 = vmatprep.subr.bf16.mxu0 0
    %758 = vmatpush1.bf16.msra.mxu0 0
    %759 = vmatprep.subr.bf16.mxu0 0
    %760 = vmatpush1.bf16.msra.mxu0 0
    %761 = vmatprep.mubr.bf16.mxu0 0
    %762 = vmatmul.mubr.bf16.gmra.mrb[0].mxu0 %v724
    %v763 = vpop.f32.mrb[0].mxu0
    %v764 = vadd.f32 %v293, %v763
    %v765 = vpop.f32.mrb[0].mxu0
    %v766 = vpop.f32.mrb[0].mxu0
    %v767 = vadd.f32 %v293, %v766
    %v768 = vpop.f32.mrb[0].mxu0
    %769 = vmatprep.mubr.bf16.mxu0 0
    %770 = vmatmul.mubr.bf16.gmra.mrb[0].mxu0 %v727
    %v771 = vpop.f32.mrb[0].mxu0
    %v772 = vadd.f32 %v293, %v771
    %v773 = vpop.f32.mrb[0].mxu0
    %v774 = vpop.f32.mrb[0].mxu0
    %v775 = vadd.f32 %v293, %v774
    %v776 = vpop.f32.mrb[0].mxu0
    %777 = vdwg.mxu0
    %v778 = vsub.f32 %v764, %v89
    %v779 = vsub.f32 %v767, %v90
    %v780 = vsub.f32 %v772, %v91
    %v781 = vsub.f32 %v775, %v92
    %v782 = vmul.f32 %v778, %v778
    %v783 = vmul.f32 %v779, %v779
    %v784 = vmul.f32 %v780, %v780
    %v785 = vmul.f32 %v781, %v781
    %v786 = vlaneseq
    %v787 = vshrl.u32 %v786, 7
    %v788 = vadd.s32 %v787, 8
    %s789 = smul.u32 0, 16
    %v790 = vstv %s789
    %v791 = vadd.s32 %v790, %v787
    %v792 = vadd.s32 %v790, %v788
    %vm793 = vcmp.lt.s32.totalorder %v791, 14
    %vm794 = vcmp.lt.s32.totalorder %v792, 14
    %v795 = vsel %vm793, 1, 0
    %v796 = vsel %vm794, 1, 0
    %v797 = vcvt.s32.f32 %v795
    %v798 = vcvt.s32.f32 %v796
    %v799 = vmul.f32 %v782, %v797
    %v800 = vmul.f32 %v783, %v798
    %v801 = vmul.f32 %v784, %v797
    %v802 = vmul.f32 %v785, %v798
    %v803 = vadd.f32 %v799, %v800
    %v804 = vrot.slane %v803, 4
    %v805 = vadd.f32 %v803, %v804
    %v806 = vrot.slane %v805, 2
    %v807 = vadd.f32 %v805, %v806
    %v808 = vrot.slane %v807, 1
    %v809 = vadd.f32 %v807, %v808
    %v810 = vadd.f32 %v801, %v802
    %v811 = vrot.slane %v810, 4
    %v812 = vadd.f32 %v810, %v811
    %v813 = vrot.slane %v812, 2
    %v814 = vadd.f32 %v812, %v813
    %v815 = vrot.slane %v814, 1
    %v816 = vadd.f32 %v814, %v815
    %vm819 = vcmask 1041409
    %v820 = vsel %vm819, %v816, %v809
    %822 = vst [vmem:[#allocation10] sm:$0x3] %v820
    // Predicated region
    $region46: #{tpu_custom_call.1} parent=1 // pred_check
      _
    $region47: #{tpu_custom_call.1} parent=1 // pred_check_branch
      %824 = sbr.rel (0) target = $region49
    $region48: #{tpu_custom_call.1} parent=1 // pred_region
      %s826 = ssub.s32 32, 32
      %827 = vsyncadd [#allocation4], %s826
      %s829 = sshll.u32 [#allocation10], 4
      %s830 = int_to_ptr.vmem [resolvable:$true] %s829
      %832 = dma.vmem_to_hbm [thread:$0]  %s830, 32, %s7, [#allocation4]
    $region49: #{tpu_custom_call.1} parent=1 // pred_fallthru
      _
    // Predicated region
    $region50: #{tpu_custom_call.1} parent=1 // pred_check
      _
    $region51: #{tpu_custom_call.1} parent=1 // pred_check_branch
      %834 = sbr.rel (0) target = $region53
    $region52: #{tpu_custom_call.1} parent=1 // pred_region
      %835 = dma.done [#allocation4], 32
    $region53: #{tpu_custom_call.1} parent=1 // pred_fallthru
      _
    %836 = vsyncpa [#allocation3], 1
    %837 = vsyncpa [#allocation6], 1
    %838 = vsyncpa [#allocation9], 1
    %839 = vsyncpa [#allocation4], 1

</llo_original>
